<compile_context>
chip_gen: v7x
topology: tpu7x:2x2x1
jax: 0.10.0
libtpu: 0.0.40
codegen_flags: <defaults>
</compile_context>

<pallas_src>
import jax
import jax.numpy as jnp
from jax.experimental import pallas as pl
from jax.experimental.pallas import tpu as pltpu

# ---- RippleNet hyper-parameters (small, consistent with the module) ----
DIM = 16
N_HOP = 2
N_MEMORY = 8
BATCH = 2
N_ENTITY = 64
N_RELATION = 16
KGE_WEIGHT = 0.01
L2_WEIGHT = 1e-7

_PAD = 8            # item / label sections padded to 8 rows (sublane aligned)
_OUT_ROWS = 8       # output slab is one (8, 128) f32 tile


def _total_sum2d(x):
    """Full reduction of a 2-D array to (1, 1)."""
    s = jnp.sum(x, axis=1, keepdims=True)
    return jnp.sum(s, axis=0, keepdims=True)


def _make_kernel(B, M, NH, D, NE, NR):
    BM = B * M
    DD = D * D
    ENT_HT = 2 * NH * BM            # h rows (NH*BM) then t rows (NH*BM)
    ENT_ROWS = ENT_HT + _PAD        # + padded item section
    REL_OFF = ENT_ROWS
    LAB_OFF = REL_OFF + NH * BM
    assert (D & (D - 1)) == 0, "D must be a power of two for the kron masks"
    log2d = D.bit_length() - 1

    ROW_ITEM = 0
    ROW_O = B
    ROW_SCORE = B + NH * B
    assert ROW_SCORE + B <= _OUT_ROWS
    assert D + 4 <= 128

    def kernel(ent_ref, rel_ref, wt_ref, idx_ref, out_ref):
        E = ent_ref[...]                  # (NE, D)   entity table
        Rf = rel_ref[...]                 # (NR, D*D) relation table (flat rows)
        wt = wt_ref[...]                  # (D, D) = W^T of transform_matrix
        idx = idx_ref[...]                # (LAB_OFF+_PAD, 1) int32 packed slab

        ent_idx = idx[0:ENT_ROWS]                         # h | t | item(+pad)
        rel_idx = idx[REL_OFF:REL_OFF + NH * BM]
        y = idx[LAB_OFF:LAB_OFF + B].astype(jnp.float32)  # (B, 1)

        # ---- batched one-hot gathers on the MXU ----
        ent_iota = jax.lax.broadcasted_iota(jnp.int32, (ENT_ROWS, NE), 1)
        onehot_e = (ent_iota == ent_idx).astype(jnp.float32)
        ent_rows = jnp.dot(onehot_e, E,
                           preferred_element_type=jnp.float32)   # (ENT_ROWS, D)

        rel_iota = jax.lax.broadcasted_iota(jnp.int32, (NH * BM, NR), 1)
        onehot_r = (rel_iota == rel_idx).astype(jnp.float32)
        r_all = jnp.dot(onehot_r, Rf,
                        preferred_element_type=jnp.float32)      # (NH*BM, DD)

        v = ent_rows[ENT_HT:ENT_HT + B]                          # item emb (B, D)

        # ---- kron-expansion matrices (lane-dense layout helpers) ----
        # x @ rep_mat : out[*, d*D+e] = x[*, d];  x @ tile_mat : out[*, d*D+e] = x[*, e]
        row_iota = jax.lax.broadcasted_iota(jnp.int32, (D, DD), 0)
        lane_iota = jax.lax.broadcasted_iota(jnp.int32, (D, DD), 1)
        rep_mat = ((lane_iota >> log2d) == row_iota).astype(jnp.float32)
        tile_mat = ((lane_iota & (D - 1)) == row_iota).astype(jnp.float32)

        ht_tile = jnp.dot(ent_rows[0:ENT_HT], tile_mat,
                          preferred_element_type=jnp.float32)    # (2*NH*BM, DD)
        h_rep = jnp.dot(ent_rows[0:NH * BM], rep_mat,
                        preferred_element_type=jnp.float32)      # (NH*BM, DD)

        # ---- L2 term for all hops at once (lane-dense r, small h/t slab) ----
        ht = ent_rows[0:ENT_HT]
        l2 = _total_sum2d(ht * ht) + _total_sum2d(r_all * r_all)  # (1, 1)

        user = jnp.zeros((B, D), jnp.float32)
        kge = jnp.zeros((1, 1), jnp.float32)
        o_hops = []

        for hop in range(NH):                       # static unroll, n_hop = 2
            hs = hop * BM
            ts = NH * BM + hop * BM
            r3 = r_all[hs:hs + BM].reshape(B, M, DD)
            h_tile3 = ht_tile[hs:hs + BM].reshape(B, M, DD)
            t_tile3 = ht_tile[ts:ts + BM].reshape(B, M, DD)
            h_rep3 = h_rep[hs:hs + BM].reshape(B, M, DD)
            t3 = ent_rows[ts:ts + BM].reshape(B, M, D)

            # logits[b,m] = sum_{d,e} r[b,m,d,e] * v[b,d] * h[b,m,e]
            v_rep = jnp.dot(v, rep_mat, preferred_element_type=jnp.float32)
            logits = jnp.sum(r3 * h_tile3 * v_rep[:, None, :], axis=-1)  # (B, M)
            # hRt[b,m] = sum_{d,e} r[b,m,d,e] * h[b,m,d] * t[b,m,e]
            hRt = jnp.sum(r3 * h_rep3 * t_tile3, axis=-1)                # (B, M)

            # ---- softmax over memories ----
            logits = logits - jnp.max(logits, axis=1, keepdims=True)
            ex = jnp.exp(logits)
            p = ex * pl.reciprocal(jnp.sum(ex, axis=1, keepdims=True),
                                   approx=True)
            o = jnp.sum(t3 * p[:, :, None], axis=1)                      # (B, D)
            o_hops.append(o)

            # 'plus_transform': item = (item + o) @ W^T (MXU)
            v = jnp.dot(v + o, wt, preferred_element_type=jnp.float32)
            user = user + o                                              # all hops

            sig = pl.reciprocal(1.0 + jnp.exp(-hRt), approx=True)        # (B, M)
            kge = kge + _total_sum2d(sig) * (1.0 / (B * M))

        # ---- finalize: scores + losses ----
        raw = jnp.sum(v * user, axis=1, keepdims=True)                   # (B, 1)
        s = 1.0 / (1.0 + jnp.exp(-raw))                                  # exact sigmoid
        # BCE in softplus form: mean(softplus(raw) - y*raw)  (no log of s)
        sp = jnp.maximum(raw, 0.0) + jnp.log(1.0 + jnp.exp(-jnp.abs(raw)))
        base = _total_sum2d(sp - y * raw) * (1.0 / B)                    # (1, 1)
        kge_loss = -KGE_WEIGHT * kge
        l2_loss = L2_WEIGHT * l2
        loss = base + kge_loss + l2_loss

        # ---- single lane-dense output slab, written once per region ----
        out_ref[...] = jnp.zeros((_OUT_ROWS, 128), jnp.float32)
        out_ref[ROW_ITEM:ROW_ITEM + B, 0:D] = v
        for hop in range(NH):
            out_ref[ROW_O + hop * B:ROW_O + (hop + 1) * B, 0:D] = o_hops[hop]
        out_ref[ROW_SCORE:ROW_SCORE + B, 0:1] = s
        out_ref[0:1, D:D + 1] = base
        out_ref[0:1, D + 1:D + 2] = kge_loss
        out_ref[0:1, D + 2:D + 3] = l2_loss
        out_ref[0:1, D + 3:D + 4] = loss

    return kernel


def ripplenet_forward(entity_emb, relation_emb, transform_w, items, labels,
                      mem_h, mem_r, mem_t):
    """entity_emb: (NE, D) f32, relation_emb: (NR, D*D) f32,
       transform_w: (D, D) nn.Linear weight (no bias),
       items/labels: (B,) int, mem_h/r/t: (n_hop, B, M) int."""
    NE, D = entity_emb.shape
    NR = relation_emb.shape[0]
    NH, B, M = mem_h.shape

    kernel = _make_kernel(B, M, NH, D, NE, NR)

    # Pack every integer input into one int32 slab: [h | t | item(pad8) | r | labels(pad8)]
    item_pad = jnp.zeros((_PAD,), jnp.int32).at[:B].set(items.astype(jnp.int32))
    lab_pad = jnp.zeros((_PAD,), jnp.int32).at[:B].set(labels.astype(jnp.int32))
    idx_slab = jnp.concatenate([
        mem_h.astype(jnp.int32).reshape(-1),
        mem_t.astype(jnp.int32).reshape(-1),
        item_pad,
        mem_r.astype(jnp.int32).reshape(-1),
        lab_pad,
    ]).reshape(-1, 1)

    wt = jnp.transpose(transform_w).astype(jnp.float32)   # kernel computes x @ W^T

    vmem = pltpu.MemorySpace.VMEM
    slab = pl.pallas_call(
        kernel,
        out_shape=jax.ShapeDtypeStruct((_OUT_ROWS, 128), jnp.float32),
        in_specs=[pl.BlockSpec(memory_space=vmem)] * 4,
        out_specs=pl.BlockSpec(memory_space=vmem),
    )(entity_emb.astype(jnp.float32), relation_emb.astype(jnp.float32),
      wt, idx_slab)

    row_item, row_o, row_score = 0, B, B + NH * B
    item_final = slab[row_item:row_item + B, 0:D]
    o_all = jnp.stack([slab[row_o + h * B:row_o + (h + 1) * B, 0:D]
                       for h in range(NH)])
    scores = slab[row_score:row_score + B, 0]
    return dict(
        scores=scores,
        o_list=o_all,
        item_embeddings=item_final,
        base_loss=slab[0, D],
        kge_loss=slab[0, D + 1],
        l2_loss=slab[0, D + 2],
        loss=slab[0, D + 3],
    )


def ripplenet_reference(entity_emb, relation_emb, transform_w, items, labels,
                        mem_h, mem_r, mem_t):
    """Pure-JAX reference mirroring the PyTorch forward pass."""
    NH, B, M = mem_h.shape
    D = entity_emb.shape[1]
    wt = transform_w.T
    item = entity_emb[items]
    o_list = []
    kge = 0.0
    l2 = 0.0
    for hop in range(NH):
        h = entity_emb[mem_h[hop]]                              # (B, M, D)
        t = entity_emb[mem_t[hop]]                              # (B, M, D)
        r = relation_emb[mem_r[hop]].reshape(B, M, D, D)        # (B, M, D, D)
        Rh = jnp.sum(r * h[:, :, None, :], axis=-1)             # (B, M, D)
        probs = jnp.sum(Rh * item[:, None, :], axis=-1)         # (B, M)
        p = jax.nn.softmax(probs, axis=1)
        o = jnp.sum(t * p[:, :, None], axis=1)                  # (B, D)
        item = jnp.sum((item + o)[:, :, None] * wt[None, :, :], axis=1)
        o_list.append(o)
        hRt = jnp.sum(jnp.sum(r * (h[:, :, :, None] * t[:, :, None, :]),
                              axis=-1), axis=-1)
        kge = kge + jnp.mean(jax.nn.sigmoid(hRt))
        l2 = l2 + jnp.sum(h * h) + jnp.sum(t * t) + jnp.sum(r * r)
    user = sum(o_list)                                          # using_all_hops
    raw = jnp.sum(item * user, axis=1)
    scores = jax.nn.sigmoid(raw)
    y = labels.astype(jnp.float32)
    base = -jnp.mean(y * jnp.log(scores) + (1.0 - y) * jnp.log(1.0 - scores))
    kge_loss = -KGE_WEIGHT * kge
    l2_loss = L2_WEIGHT * l2
    return scores, base, kge_loss, l2_loss, base + kge_loss + l2_loss


if __name__ == "__main__":
    key = jax.random.PRNGKey(0)
    k_ent, k_rel, k_w, k_items, k_h, k_r, k_t, k_lab = jax.random.split(key, 8)

    # Deterministic synthetic parameters (shapes from __init__).
    entity_emb = 0.1 * jax.random.normal(k_ent, (N_ENTITY, DIM), jnp.float32)
    relation_emb = 0.1 * jax.random.normal(k_rel, (N_RELATION, DIM * DIM),
                                           jnp.float32)
    transform_w = 0.1 * jax.random.normal(k_w, (DIM, DIM), jnp.float32)

    # Synthetic forward inputs.
    items = jax.random.randint(k_items, (BATCH,), 0, N_ENTITY)
    labels = jax.random.randint(k_lab, (BATCH,), 0, 2)
    mem_h = jax.random.randint(k_h, (N_HOP, BATCH, N_MEMORY), 0, N_ENTITY)
    mem_r = jax.random.randint(k_r, (N_HOP, BATCH, N_MEMORY), 0, N_RELATION)
    mem_t = jax.random.randint(k_t, (N_HOP, BATCH, N_MEMORY), 0, N_ENTITY)

    out = ripplenet_forward(entity_emb, relation_emb, transform_w,
                            items, labels, mem_h, mem_r, mem_t)
    out = jax.block_until_ready(out)

    # Correctness check against the pure-JAX reference.
    ref_scores, ref_base, ref_kge, ref_l2, ref_loss = ripplenet_reference(
        entity_emb, relation_emb, transform_w, items, labels,
        mem_h, mem_r, mem_t)
    assert jnp.allclose(out["scores"], ref_scores, rtol=2e-3, atol=2e-3)
    assert jnp.allclose(out["base_loss"], ref_base, rtol=2e-3, atol=2e-3)
    assert jnp.allclose(out["kge_loss"], ref_kge, rtol=2e-3, atol=1e-4)
    assert jnp.allclose(out["l2_loss"], ref_l2, rtol=2e-3, atol=1e-4)
    assert jnp.allclose(out["loss"], ref_loss, rtol=2e-3, atol=2e-3)

    print("KERNEL_OK")
</pallas_src>

<mosaic_0001>
module attributes {stable_mosaic.version = 11 : i64} {
  func.func @kernel(%arg0: memref<64x16xf32, #tpu.memory_space<vmem>>, %arg1: memref<16x256xf32, #tpu.memory_space<vmem>>, %arg2: memref<16x16xf32, #tpu.memory_space<vmem>>, %arg3: memref<112x1xi32, #tpu.memory_space<vmem>>, %arg4: memref<8x128xf32, #tpu.memory_space<vmem>>) attributes {dimension_semantics = [], scalar_prefetch = 0 : i64, scratch_operands = 0 : i64, tpu.core_type = #tpu.core_type<tc>} {
    %c0 = arith.constant 0 : index
    %c0_0 = arith.constant 0 : index
    %0 = vector.load %arg0[%c0, %c0_0] : memref<64x16xf32, #tpu.memory_space<vmem>>, vector<64x16xf32>
    %c0_1 = arith.constant 0 : index
    %c0_2 = arith.constant 0 : index
    %1 = vector.load %arg1[%c0_1, %c0_2] : memref<16x256xf32, #tpu.memory_space<vmem>>, vector<16x256xf32>
    %c0_3 = arith.constant 0 : index
    %c0_4 = arith.constant 0 : index
    %2 = vector.load %arg2[%c0_3, %c0_4] : memref<16x16xf32, #tpu.memory_space<vmem>>, vector<16x16xf32>
    %c0_5 = arith.constant 0 : index
    %c0_6 = arith.constant 0 : index
    %3 = vector.load %arg3[%c0_5, %c0_6] : memref<112x1xi32, #tpu.memory_space<vmem>>, vector<112x1xi32>
    %4 = vector.extract_strided_slice %3 {offsets = [0, 0], sizes = [72, 1], strides = [1, 1]} : vector<112x1xi32> to vector<72x1xi32>
    %5 = vector.extract_strided_slice %3 {offsets = [72, 0], sizes = [32, 1], strides = [1, 1]} : vector<112x1xi32> to vector<32x1xi32>
    %6 = vector.extract_strided_slice %3 {offsets = [104, 0], sizes = [2, 1], strides = [1, 1]} : vector<112x1xi32> to vector<2x1xi32>
    %7 = arith.sitofp %6 : vector<2x1xi32> to vector<2x1xf32>
    %8 = tpu.iota {dimensions = array<i32: 1>} : vector<72x64xi32>
    %9 = vector.broadcast %4 : vector<72x1xi32> to vector<72x64xi32>
    %10 = arith.cmpi eq, %8, %9 : vector<72x64xi32>
    %11 = arith.extui %10 : vector<72x64xi1> to vector<72x64xi32>
    %12 = arith.sitofp %11 : vector<72x64xi32> to vector<72x64xf32>
    %cst = arith.constant dense<0.000000e+00> : vector<72x16xf32>
    %13 = tpu.matmul %12, %0, %cst {dimension_numbers = #tpu.dot_dimension_numbers<[1], [0], [0], [1], [0, 0, 1, 1], [], []>} : vector<72x64xf32>, vector<64x16xf32>, vector<72x16xf32> -> vector<72x16xf32>
    %14 = tpu.iota {dimensions = array<i32: 1>} : vector<32x16xi32>
    %15 = vector.broadcast %5 : vector<32x1xi32> to vector<32x16xi32>
    %16 = arith.cmpi eq, %14, %15 : vector<32x16xi32>
    %17 = arith.extui %16 : vector<32x16xi1> to vector<32x16xi32>
    %18 = arith.sitofp %17 : vector<32x16xi32> to vector<32x16xf32>
    %cst_7 = arith.constant dense<0.000000e+00> : vector<32x256xf32>
    %19 = tpu.matmul %18, %1, %cst_7 {dimension_numbers = #tpu.dot_dimension_numbers<[1], [0], [0], [1], [0, 0, 1, 1], [], []>} : vector<32x16xf32>, vector<16x256xf32>, vector<32x256xf32> -> vector<32x256xf32>
    %20 = vector.extract_strided_slice %13 {offsets = [64, 0], sizes = [2, 16], strides = [1, 1]} : vector<72x16xf32> to vector<2x16xf32>
    %21 = tpu.iota {dimensions = array<i32: 0>} : vector<16x256xi32>
    %22 = tpu.iota {dimensions = array<i32: 1>} : vector<16x256xi32>
    %c4_i32 = arith.constant 4 : i32
    %23 = vector.broadcast %c4_i32 : i32 to vector<16x256xi32>
    %24 = arith.shrsi %22, %23 : vector<16x256xi32>
    %25 = arith.cmpi eq, %24, %21 : vector<16x256xi32>
    %26 = arith.extui %25 : vector<16x256xi1> to vector<16x256xi32>
    %27 = arith.sitofp %26 : vector<16x256xi32> to vector<16x256xf32>
    %c15_i32 = arith.constant 15 : i32
    %28 = vector.broadcast %c15_i32 : i32 to vector<16x256xi32>
    %29 = arith.andi %22, %28 : vector<16x256xi32>
    %30 = arith.cmpi eq, %29, %21 : vector<16x256xi32>
    %31 = arith.extui %30 : vector<16x256xi1> to vector<16x256xi32>
    %32 = arith.sitofp %31 : vector<16x256xi32> to vector<16x256xf32>
    %33 = vector.extract_strided_slice %13 {offsets = [0, 0], sizes = [64, 16], strides = [1, 1]} : vector<72x16xf32> to vector<64x16xf32>
    %cst_8 = arith.constant dense<0.000000e+00> : vector<64x256xf32>
    %34 = tpu.matmul %33, %32, %cst_8 {dimension_numbers = #tpu.dot_dimension_numbers<[1], [0], [0], [1], [0, 0, 1, 1], [], []>} : vector<64x16xf32>, vector<16x256xf32>, vector<64x256xf32> -> vector<64x256xf32>
    %35 = vector.extract_strided_slice %13 {offsets = [0, 0], sizes = [32, 16], strides = [1, 1]} : vector<72x16xf32> to vector<32x16xf32>
    %cst_9 = arith.constant dense<0.000000e+00> : vector<32x256xf32>
    %36 = tpu.matmul %35, %27, %cst_9 {dimension_numbers = #tpu.dot_dimension_numbers<[1], [0], [0], [1], [0, 0, 1, 1], [], []>} : vector<32x16xf32>, vector<16x256xf32>, vector<32x256xf32> -> vector<32x256xf32>
    %37 = vector.extract_strided_slice %13 {offsets = [0, 0], sizes = [64, 16], strides = [1, 1]} : vector<72x16xf32> to vector<64x16xf32>
    %38 = arith.mulf %37, %37 : vector<64x16xf32>
    %cst_10 = arith.constant dense<0.000000e+00> : vector<64xf32>
    %39 = vector.multi_reduction <add>, %38, %cst_10 [1] : vector<64x16xf32> to vector<64xf32>
    %40 = vector.shape_cast %39 : vector<64xf32> to vector<64x1xf32>
    %cst_11 = arith.constant dense<0.000000e+00> : vector<1xf32>
    %41 = vector.multi_reduction <add>, %40, %cst_11 [0] : vector<64x1xf32> to vector<1xf32>
    %42 = vector.shape_cast %41 : vector<1xf32> to vector<1x1xf32>
    %43 = arith.mulf %19, %19 : vector<32x256xf32>
    %cst_12 = arith.constant dense<0.000000e+00> : vector<32xf32>
    %44 = vector.multi_reduction <add>, %43, %cst_12 [1] : vector<32x256xf32> to vector<32xf32>
    %45 = vector.shape_cast %44 : vector<32xf32> to vector<32x1xf32>
    %cst_13 = arith.constant dense<0.000000e+00> : vector<1xf32>
    %46 = vector.multi_reduction <add>, %45, %cst_13 [0] : vector<32x1xf32> to vector<1xf32>
    %47 = vector.shape_cast %46 : vector<1xf32> to vector<1x1xf32>
    %48 = arith.addf %42, %47 : vector<1x1xf32>
    %cst_14 = arith.constant 0.000000e+00 : f32
    %49 = vector.broadcast %cst_14 : f32 to vector<2x16xf32>
    %cst_15 = arith.constant 0.000000e+00 : f32
    %50 = vector.broadcast %cst_15 : f32 to vector<1x1xf32>
    %51 = vector.extract_strided_slice %19 {offsets = [0, 0], sizes = [16, 256], strides = [1, 1]} : vector<32x256xf32> to vector<16x256xf32>
    %52 = vector.shape_cast %51 : vector<16x256xf32> to vector<2x8x256xf32>
    %53 = vector.extract_strided_slice %34 {offsets = [0, 0], sizes = [16, 256], strides = [1, 1]} : vector<64x256xf32> to vector<16x256xf32>
    %54 = vector.shape_cast %53 : vector<16x256xf32> to vector<2x8x256xf32>
    %55 = vector.extract_strided_slice %34 {offsets = [32, 0], sizes = [16, 256], strides = [1, 1]} : vector<64x256xf32> to vector<16x256xf32>
    %56 = vector.shape_cast %55 : vector<16x256xf32> to vector<2x8x256xf32>
    %57 = vector.extract_strided_slice %36 {offsets = [0, 0], sizes = [16, 256], strides = [1, 1]} : vector<32x256xf32> to vector<16x256xf32>
    %58 = vector.shape_cast %57 : vector<16x256xf32> to vector<2x8x256xf32>
    %59 = vector.extract_strided_slice %13 {offsets = [32, 0], sizes = [16, 16], strides = [1, 1]} : vector<72x16xf32> to vector<16x16xf32>
    %60 = vector.shape_cast %59 : vector<16x16xf32> to vector<2x8x16xf32>
    %cst_16 = arith.constant dense<0.000000e+00> : vector<2x256xf32>
    %61 = tpu.matmul %20, %27, %cst_16 {dimension_numbers = #tpu.dot_dimension_numbers<[1], [0], [0], [1], [0, 0, 1, 1], [], []>} : vector<2x16xf32>, vector<16x256xf32>, vector<2x256xf32> -> vector<2x256xf32>
    %62 = arith.mulf %52, %54 : vector<2x8x256xf32>
    %63 = vector.shape_cast %61 : vector<2x256xf32> to vector<2x1x256xf32>
    %64 = vector.broadcast %63 : vector<2x1x256xf32> to vector<2x8x256xf32>
    %65 = arith.mulf %62, %64 : vector<2x8x256xf32>
    %cst_17 = arith.constant dense<0.000000e+00> : vector<2x8xf32>
    %66 = vector.multi_reduction <add>, %65, %cst_17 [2] : vector<2x8x256xf32> to vector<2x8xf32>
    %67 = arith.mulf %52, %58 : vector<2x8x256xf32>
    %68 = arith.mulf %67, %56 : vector<2x8x256xf32>
    %cst_18 = arith.constant dense<0.000000e+00> : vector<2x8xf32>
    %69 = vector.multi_reduction <add>, %68, %cst_18 [2] : vector<2x8x256xf32> to vector<2x8xf32>
    %cst_19 = arith.constant dense<0xFF800000> : vector<2xf32>
    %70 = vector.multi_reduction <maximumf>, %66, %cst_19 [1] : vector<2x8xf32> to vector<2xf32>
    %71 = vector.shape_cast %70 : vector<2xf32> to vector<2x1xf32>
    %72 = vector.broadcast %71 : vector<2x1xf32> to vector<2x8xf32>
    %73 = arith.subf %66, %72 : vector<2x8xf32>
    %74 = math.exp %73 : vector<2x8xf32>
    %cst_20 = arith.constant dense<0.000000e+00> : vector<2xf32>
    %75 = vector.multi_reduction <add>, %74, %cst_20 [1] : vector<2x8xf32> to vector<2xf32>
    %76 = vector.shape_cast %75 : vector<2xf32> to vector<2x1xf32>
    %77 = tpu.reciprocal %76 {approx = true} : vector<2x1xf32> -> vector<2x1xf32>
    %78 = vector.broadcast %77 : vector<2x1xf32> to vector<2x8xf32>
    %79 = arith.mulf %74, %78 : vector<2x8xf32>
    %80 = vector.shape_cast %79 : vector<2x8xf32> to vector<2x8x1xf32>
    %81 = vector.broadcast %80 : vector<2x8x1xf32> to vector<2x8x16xf32>
    %82 = arith.mulf %60, %81 : vector<2x8x16xf32>
    %cst_21 = arith.constant dense<0.000000e+00> : vector<2x16xf32>
    %83 = vector.multi_reduction <add>, %82, %cst_21 [1] : vector<2x8x16xf32> to vector<2x16xf32>
    %84 = arith.addf %20, %83 : vector<2x16xf32>
    %cst_22 = arith.constant dense<0.000000e+00> : vector<2x16xf32>
    %85 = tpu.matmul %84, %2, %cst_22 {dimension_numbers = #tpu.dot_dimension_numbers<[1], [0], [0], [1], [0, 0, 1, 1], [], []>} : vector<2x16xf32>, vector<16x16xf32>, vector<2x16xf32> -> vector<2x16xf32>
    %86 = arith.addf %49, %83 : vector<2x16xf32>
    %cst_23 = arith.constant 0.000000e+00 : f32
    %87 = vector.broadcast %cst_23 : f32 to vector<2x8xf32>
    %88 = arith.subf %87, %69 : vector<2x8xf32>
    %89 = math.exp %88 : vector<2x8xf32>
    %cst_24 = arith.constant 1.000000e+00 : f32
    %90 = vector.broadcast %cst_24 : f32 to vector<2x8xf32>
    %91 = arith.addf %90, %89 : vector<2x8xf32>
    %92 = tpu.reciprocal %91 {approx = true} : vector<2x8xf32> -> vector<2x8xf32>
    %cst_25 = arith.constant dense<0.000000e+00> : vector<2xf32>
    %93 = vector.multi_reduction <add>, %92, %cst_25 [1] : vector<2x8xf32> to vector<2xf32>
    %94 = vector.shape_cast %93 : vector<2xf32> to vector<2x1xf32>
    %cst_26 = arith.constant dense<0.000000e+00> : vector<1xf32>
    %95 = vector.multi_reduction <add>, %94, %cst_26 [0] : vector<2x1xf32> to vector<1xf32>
    %96 = vector.shape_cast %95 : vector<1xf32> to vector<1x1xf32>
    %cst_27 = arith.constant 6.250000e-02 : f32
    %97 = vector.broadcast %cst_27 : f32 to vector<1x1xf32>
    %98 = arith.mulf %96, %97 : vector<1x1xf32>
    %99 = arith.addf %50, %98 : vector<1x1xf32>
    %100 = vector.extract_strided_slice %19 {offsets = [16, 0], sizes = [16, 256], strides = [1, 1]} : vector<32x256xf32> to vector<16x256xf32>
    %101 = vector.shape_cast %100 : vector<16x256xf32> to vector<2x8x256xf32>
    %102 = vector.extract_strided_slice %34 {offsets = [16, 0], sizes = [16, 256], strides = [1, 1]} : vector<64x256xf32> to vector<16x256xf32>
    %103 = vector.shape_cast %102 : vector<16x256xf32> to vector<2x8x256xf32>
    %104 = vector.extract_strided_slice %34 {offsets = [48, 0], sizes = [16, 256], strides = [1, 1]} : vector<64x256xf32> to vector<16x256xf32>
    %105 = vector.shape_cast %104 : vector<16x256xf32> to vector<2x8x256xf32>
    %106 = vector.extract_strided_slice %36 {offsets = [16, 0], sizes = [16, 256], strides = [1, 1]} : vector<32x256xf32> to vector<16x256xf32>
    %107 = vector.shape_cast %106 : vector<16x256xf32> to vector<2x8x256xf32>
    %108 = vector.extract_strided_slice %13 {offsets = [48, 0], sizes = [16, 16], strides = [1, 1]} : vector<72x16xf32> to vector<16x16xf32>
    %109 = vector.shape_cast %108 : vector<16x16xf32> to vector<2x8x16xf32>
    %cst_28 = arith.constant dense<0.000000e+00> : vector<2x256xf32>
    %110 = tpu.matmul %85, %27, %cst_28 {dimension_numbers = #tpu.dot_dimension_numbers<[1], [0], [0], [1], [0, 0, 1, 1], [], []>} : vector<2x16xf32>, vector<16x256xf32>, vector<2x256xf32> -> vector<2x256xf32>
    %111 = arith.mulf %101, %103 : vector<2x8x256xf32>
    %112 = vector.shape_cast %110 : vector<2x256xf32> to vector<2x1x256xf32>
    %113 = vector.broadcast %112 : vector<2x1x256xf32> to vector<2x8x256xf32>
    %114 = arith.mulf %111, %113 : vector<2x8x256xf32>
    %cst_29 = arith.constant dense<0.000000e+00> : vector<2x8xf32>
    %115 = vector.multi_reduction <add>, %114, %cst_29 [2] : vector<2x8x256xf32> to vector<2x8xf32>
    %116 = arith.mulf %101, %107 : vector<2x8x256xf32>
    %117 = arith.mulf %116, %105 : vector<2x8x256xf32>
    %cst_30 = arith.constant dense<0.000000e+00> : vector<2x8xf32>
    %118 = vector.multi_reduction <add>, %117, %cst_30 [2] : vector<2x8x256xf32> to vector<2x8xf32>
    %cst_31 = arith.constant dense<0xFF800000> : vector<2xf32>
    %119 = vector.multi_reduction <maximumf>, %115, %cst_31 [1] : vector<2x8xf32> to vector<2xf32>
    %120 = vector.shape_cast %119 : vector<2xf32> to vector<2x1xf32>
    %121 = vector.broadcast %120 : vector<2x1xf32> to vector<2x8xf32>
    %122 = arith.subf %115, %121 : vector<2x8xf32>
    %123 = math.exp %122 : vector<2x8xf32>
    %cst_32 = arith.constant dense<0.000000e+00> : vector<2xf32>
    %124 = vector.multi_reduction <add>, %123, %cst_32 [1] : vector<2x8xf32> to vector<2xf32>
    %125 = vector.shape_cast %124 : vector<2xf32> to vector<2x1xf32>
    %126 = tpu.reciprocal %125 {approx = true} : vector<2x1xf32> -> vector<2x1xf32>
    %127 = vector.broadcast %126 : vector<2x1xf32> to vector<2x8xf32>
    %128 = arith.mulf %123, %127 : vector<2x8xf32>
    %129 = vector.shape_cast %128 : vector<2x8xf32> to vector<2x8x1xf32>
    %130 = vector.broadcast %129 : vector<2x8x1xf32> to vector<2x8x16xf32>
    %131 = arith.mulf %109, %130 : vector<2x8x16xf32>
    %cst_33 = arith.constant dense<0.000000e+00> : vector<2x16xf32>
    %132 = vector.multi_reduction <add>, %131, %cst_33 [1] : vector<2x8x16xf32> to vector<2x16xf32>
    %133 = arith.addf %85, %132 : vector<2x16xf32>
    %cst_34 = arith.constant dense<0.000000e+00> : vector<2x16xf32>
    %134 = tpu.matmul %133, %2, %cst_34 {dimension_numbers = #tpu.dot_dimension_numbers<[1], [0], [0], [1], [0, 0, 1, 1], [], []>} : vector<2x16xf32>, vector<16x16xf32>, vector<2x16xf32> -> vector<2x16xf32>
    %135 = arith.addf %86, %132 : vector<2x16xf32>
    %cst_35 = arith.constant 0.000000e+00 : f32
    %136 = vector.broadcast %cst_35 : f32 to vector<2x8xf32>
    %137 = arith.subf %136, %118 : vector<2x8xf32>
    %138 = math.exp %137 : vector<2x8xf32>
    %cst_36 = arith.constant 1.000000e+00 : f32
    %139 = vector.broadcast %cst_36 : f32 to vector<2x8xf32>
    %140 = arith.addf %139, %138 : vector<2x8xf32>
    %141 = tpu.reciprocal %140 {approx = true} : vector<2x8xf32> -> vector<2x8xf32>
    %cst_37 = arith.constant dense<0.000000e+00> : vector<2xf32>
    %142 = vector.multi_reduction <add>, %141, %cst_37 [1] : vector<2x8xf32> to vector<2xf32>
    %143 = vector.shape_cast %142 : vector<2xf32> to vector<2x1xf32>
    %cst_38 = arith.constant dense<0.000000e+00> : vector<1xf32>
    %144 = vector.multi_reduction <add>, %143, %cst_38 [0] : vector<2x1xf32> to vector<1xf32>
    %145 = vector.shape_cast %144 : vector<1xf32> to vector<1x1xf32>
    %cst_39 = arith.constant 6.250000e-02 : f32
    %146 = vector.broadcast %cst_39 : f32 to vector<1x1xf32>
    %147 = arith.mulf %145, %146 : vector<1x1xf32>
    %148 = arith.addf %99, %147 : vector<1x1xf32>
    %149 = arith.mulf %134, %135 : vector<2x16xf32>
    %cst_40 = arith.constant dense<0.000000e+00> : vector<2xf32>
    %150 = vector.multi_reduction <add>, %149, %cst_40 [1] : vector<2x16xf32> to vector<2xf32>
    %151 = vector.shape_cast %150 : vector<2xf32> to vector<2x1xf32>
    %cst_41 = arith.constant 0.000000e+00 : f32
    %152 = vector.broadcast %cst_41 : f32 to vector<2x1xf32>
    %153 = arith.subf %152, %151 : vector<2x1xf32>
    %154 = math.exp %153 : vector<2x1xf32>
    %cst_42 = arith.constant 1.000000e+00 : f32
    %155 = vector.broadcast %cst_42 : f32 to vector<2x1xf32>
    %156 = arith.addf %155, %154 : vector<2x1xf32>
    %cst_43 = arith.constant 1.000000e+00 : f32
    %157 = vector.broadcast %cst_43 : f32 to vector<2x1xf32>
    %158 = arith.divf %157, %156 : vector<2x1xf32>
    %cst_44 = arith.constant 0.000000e+00 : f32
    %159 = vector.broadcast %cst_44 : f32 to vector<2x1xf32>
    %160 = arith.maximumf %151, %159 : vector<2x1xf32>
    %161 = math.absf %151 : vector<2x1xf32>
    %cst_45 = arith.constant 0.000000e+00 : f32
    %162 = vector.broadcast %cst_45 : f32 to vector<2x1xf32>
    %163 = arith.subf %162, %161 : vector<2x1xf32>
    %164 = math.exp %163 : vector<2x1xf32>
    %cst_46 = arith.constant 1.000000e+00 : f32
    %165 = vector.broadcast %cst_46 : f32 to vector<2x1xf32>
    %166 = arith.addf %165, %164 : vector<2x1xf32>
    %167 = math.log %166 : vector<2x1xf32>
    %168 = arith.addf %160, %167 : vector<2x1xf32>
    %169 = arith.mulf %7, %151 : vector<2x1xf32>
    %170 = arith.subf %168, %169 : vector<2x1xf32>
    %cst_47 = arith.constant dense<0.000000e+00> : vector<2xf32>
    %171 = vector.multi_reduction <add>, %170, %cst_47 [1] : vector<2x1xf32> to vector<2xf32>
    %172 = vector.shape_cast %171 : vector<2xf32> to vector<2x1xf32>
    %cst_48 = arith.constant dense<0.000000e+00> : vector<1xf32>
    %173 = vector.multi_reduction <add>, %172, %cst_48 [0] : vector<2x1xf32> to vector<1xf32>
    %174 = vector.shape_cast %173 : vector<1xf32> to vector<1x1xf32>
    %cst_49 = arith.constant 5.000000e-01 : f32
    %175 = vector.broadcast %cst_49 : f32 to vector<1x1xf32>
    %176 = arith.mulf %174, %175 : vector<1x1xf32>
    %cst_50 = arith.constant -0.00999999977 : f32
    %177 = vector.broadcast %cst_50 : f32 to vector<1x1xf32>
    %178 = arith.mulf %177, %148 : vector<1x1xf32>
    %cst_51 = arith.constant 1.000000e-07 : f32
    %179 = vector.broadcast %cst_51 : f32 to vector<1x1xf32>
    %180 = arith.mulf %179, %48 : vector<1x1xf32>
    %181 = arith.addf %176, %178 : vector<1x1xf32>
    %182 = arith.addf %181, %180 : vector<1x1xf32>
    %cst_52 = arith.constant 0.000000e+00 : f32
    %183 = vector.broadcast %cst_52 : f32 to vector<8x128xf32>
    %c0_53 = arith.constant 0 : index
    %c0_54 = arith.constant 0 : index
    %184 = vector.load %arg4[%c0_53, %c0_54] : memref<8x128xf32, #tpu.memory_space<vmem>>, vector<8x128xf32>
    tpu.vector_store %arg4[%c0_53, %c0_54], %183 {strides = array<i32>} : memref<8x128xf32, #tpu.memory_space<vmem>>, vector<8x128xf32>,
    %c0_55 = arith.constant 0 : index
    %c0_56 = arith.constant 0 : index
    %185 = vector.load %arg4[%c0_55, %c0_56] : memref<8x128xf32, #tpu.memory_space<vmem>>, vector<2x16xf32>
    tpu.vector_store %arg4[%c0_55, %c0_56], %134 {strides = array<i32>} : memref<8x128xf32, #tpu.memory_space<vmem>>, vector<2x16xf32>,
    %c2 = arith.constant 2 : index
    %c0_57 = arith.constant 0 : index
    %186 = vector.load %arg4[%c2, %c0_57] : memref<8x128xf32, #tpu.memory_space<vmem>>, vector<2x16xf32>
    tpu.vector_store %arg4[%c2, %c0_57], %83 {strides = array<i32>} : memref<8x128xf32, #tpu.memory_space<vmem>>, vector<2x16xf32>,
    %c4 = arith.constant 4 : index
    %c0_58 = arith.constant 0 : index
    %187 = vector.load %arg4[%c4, %c0_58] : memref<8x128xf32, #tpu.memory_space<vmem>>, vector<2x16xf32>
    tpu.vector_store %arg4[%c4, %c0_58], %132 {strides = array<i32>} : memref<8x128xf32, #tpu.memory_space<vmem>>, vector<2x16xf32>,
    %c6 = arith.constant 6 : index
    %c0_59 = arith.constant 0 : index
    %188 = vector.load %arg4[%c6, %c0_59] : memref<8x128xf32, #tpu.memory_space<vmem>>, vector<2x1xf32>
    tpu.vector_store %arg4[%c6, %c0_59], %158 {strides = array<i32>} : memref<8x128xf32, #tpu.memory_space<vmem>>, vector<2x1xf32>,
    %c0_60 = arith.constant 0 : index
    %c16 = arith.constant 16 : index
    %189 = vector.load %arg4[%c0_60, %c16] : memref<8x128xf32, #tpu.memory_space<vmem>>, vector<1x1xf32>
    tpu.vector_store %arg4[%c0_60, %c16], %176 {strides = array<i32>} : memref<8x128xf32, #tpu.memory_space<vmem>>, vector<1x1xf32>,
    %c0_61 = arith.constant 0 : index
    %c17 = arith.constant 17 : index
    %190 = vector.load %arg4[%c0_61, %c17] : memref<8x128xf32, #tpu.memory_space<vmem>>, vector<1x1xf32>
    tpu.vector_store %arg4[%c0_61, %c17], %178 {strides = array<i32>} : memref<8x128xf32, #tpu.memory_space<vmem>>, vector<1x1xf32>,
    %c0_62 = arith.constant 0 : index
    %c18 = arith.constant 18 : index
    %191 = vector.load %arg4[%c0_62, %c18] : memref<8x128xf32, #tpu.memory_space<vmem>>, vector<1x1xf32>
    tpu.vector_store %arg4[%c0_62, %c18], %180 {strides = array<i32>} : memref<8x128xf32, #tpu.memory_space<vmem>>, vector<1x1xf32>,
    %c0_63 = arith.constant 0 : index
    %c19 = arith.constant 19 : index
    %192 = vector.load %arg4[%c0_63, %c19] : memref<8x128xf32, #tpu.memory_space<vmem>>, vector<1x1xf32>
    tpu.vector_store %arg4[%c0_63, %c19], %182 {strides = array<i32>} : memref<8x128xf32, #tpu.memory_space<vmem>>, vector<1x1xf32>,
    return
  }
}

</mosaic_0001>

<llo_original>
// kernel: tpu_custom_call.1
$region0: #{tpu_custom_call.1}
  #allocation0 [shape = 'u32[]', space=smem, size = 0x4, offset = 0x4, fixed_abs, tag = 'smem constant byte address 0x4 - core index']
  #allocation1 [shape = 'u32[144,128]{1,0:T(1,128)}', space=vmem, size = 0x12000, scoped, tag = 'internal scratch']
  %s0 = inlined_call_operand.vmem [shape: f32[64,16], index: 0, kind: input, shape index: {}]
  %s1 = inlined_call_operand.vmem [shape: f32[16,256], index: 1, kind: input, shape index: {}]
  %s2 = inlined_call_operand.vmem [shape: f32[16,16], index: 2, kind: input, shape index: {}]
  %s3 = inlined_call_operand.vmem [shape: s32[112,1], index: 3, kind: input, shape index: {}]
  %s4 = inlined_call_operand.hbm [shape: f32[8,128], index: 4, kind: output, shape index: {}]
  %s5 = sld [smem:[#allocation0]]
  $region26: #{tpu_custom_call.1} parent=0
    _
  %s7 = ssub.s32 1, %s5
  %s8 = scalar_select 0, %s7, %s5
  $region1: #{tpu_custom_call.1} parent=0
    #allocation2 [shape = 'u8[4096]{0}', space=vmem, size = 0x1000, scoped, tag = 'output window, operand 0, single buffered']
    #allocation3 [shape = 's32[1]{0}', space=sflag, size = 0x4, scoped, tag = 'scoped memory for tpu_custom_call.1']
    %9 = vsyncpa [#allocation3], 0
    // Predicated region
    $region2: #{tpu_custom_call.1} parent=1 // pred_check
      _
    $region3: #{tpu_custom_call.1} parent=1 // pred_check_branch
      %11 = sbr.rel (0) target = $region5
    $region4: #{tpu_custom_call.1} parent=1 // pred_region
      _
    $region5: #{tpu_custom_call.1} parent=1 // pred_fallthru
      _
    // Predicated region
    $region6: #{tpu_custom_call.1} parent=1 // pred_check
      _
    $region7: #{tpu_custom_call.1} parent=1 // pred_check_branch
      %13 = sbr.rel (0) target = $region9
    $region8: #{tpu_custom_call.1} parent=1 // pred_region
      _
    $region9: #{tpu_custom_call.1} parent=1 // pred_fallthru
      _
    // Predicated region
    $region10: #{tpu_custom_call.1} parent=1 // pred_check
      _
    $region11: #{tpu_custom_call.1} parent=1 // pred_check_branch
      %15 = sbr.rel (0) target = $region13
    $region12: #{tpu_custom_call.1} parent=1 // pred_region
      _
    $region13: #{tpu_custom_call.1} parent=1 // pred_fallthru
      _
    // Predicated region
    $region14: #{tpu_custom_call.1} parent=1 // pred_check
      _
    $region15: #{tpu_custom_call.1} parent=1 // pred_check_branch
      %17 = sbr.rel (0) target = $region17
    $region16: #{tpu_custom_call.1} parent=1 // pred_region
      _
    $region17: #{tpu_custom_call.1} parent=1 // pred_fallthru
      _
    %v18 = vld [vmem:[%s0] sm:$0xff]
    %v19 = vld [vmem:[%s0 + $0x8] sm:$0xff]
    %v20 = vld [vmem:[%s0 + $0x10] sm:$0xff]
    %v21 = vld [vmem:[%s0 + $0x18] sm:$0xff]
    %v22 = vld [vmem:[%s0 + $0x20] sm:$0xff]
    %v23 = vld [vmem:[%s0 + $0x28] sm:$0xff]
    %v24 = vld [vmem:[%s0 + $0x30] sm:$0xff]
    %v25 = vld [vmem:[%s0 + $0x38] sm:$0xff]
    %v26 = vld [vmem:[%s1] sm:$0xff]
    %v27 = vld [vmem:[%s1 + $0x8] sm:$0xff]
    %v28 = vld [vmem:[%s1 + $0x10] sm:$0xff]
    %v29 = vld [vmem:[%s1 + $0x18] sm:$0xff]
    %v30 = vld [vmem:[%s2] sm:$0xff]
    %v31 = vld [vmem:[%s2 + $0x8] sm:$0xff]
    %v32 = vld [vmem:[%s3] sm:$0xff]
    %v33 = vld [vmem:[%s3 + $0x8] sm:$0xff]
    %v34 = vld [vmem:[%s3 + $0x10] sm:$0xff]
    %v35 = vld [vmem:[%s3 + $0x18] sm:$0xff]
    %v36 = vld [vmem:[%s3 + $0x20] sm:$0xff]
    %v37 = vld [vmem:[%s3 + $0x28] sm:$0xff]
    %v38 = vld [vmem:[%s3 + $0x30] sm:$0xff]
    %v39 = vld [vmem:[%s3 + $0x38] sm:$0xff]
    %v40 = vld [vmem:[%s3 + $0x40] sm:$0xff]
    %v41 = vld [vmem:[%s3 + $0x48] sm:$0xff]
    %v42 = vld [vmem:[%s3 + $0x50] sm:$0xff]
    %v43 = vld [vmem:[%s3 + $0x58] sm:$0xff]
    %v44 = vld [vmem:[%s3 + $0x60] sm:$0xff]
    %v45 = vld [vmem:[%s3 + $0x68] sm:$0xff]
    %v46 = vcvt.s32.f32 %v45
    %v47 = vlaneseq
    %v48 = vand.u32 %v47, 127
    %49 = vset.pattern.permute.xlu0 0
    %50 = vperm.xlu0 %49, %v32
    %v51 = vpop.permute.xlu0 %50
    %52 = vset.pattern.permute.xlu0 0
    %53 = vperm.xlu0 %52, %v33
    %v54 = vpop.permute.xlu0 %53
    %55 = vset.pattern.permute.xlu0 0
    %56 = vperm.xlu0 %55, %v34
    %v57 = vpop.permute.xlu0 %56
    %58 = vset.pattern.permute.xlu0 0
    %59 = vperm.xlu0 %58, %v35
    %v60 = vpop.permute.xlu0 %59
    %61 = vset.pattern.permute.xlu0 0
    %62 = vperm.xlu0 %61, %v36
    %v63 = vpop.permute.xlu0 %62
    %64 = vset.pattern.permute.xlu0 0
    %65 = vperm.xlu0 %64, %v37
    %v66 = vpop.permute.xlu0 %65
    %67 = vset.pattern.permute.xlu0 0
    %68 = vperm.xlu0 %67, %v38
    %v69 = vpop.permute.xlu0 %68
    %70 = vset.pattern.permute.xlu0 0
    %71 = vperm.xlu0 %70, %v39
    %v72 = vpop.permute.xlu0 %71
    %73 = vset.pattern.permute.xlu0 0
    %74 = vperm.xlu0 %73, %v40
    %v75 = vpop.permute.xlu0 %74
    %vm76 = vcmp.eq.s32.totalorder %v48, %v51
    %vm77 = vcmp.eq.s32.totalorder %v48, %v54
    %vm78 = vcmp.eq.s32.totalorder %v48, %v57
    %vm79 = vcmp.eq.s32.totalorder %v48, %v60
    %vm80 = vcmp.eq.s32.totalorder %v48, %v63
    %vm81 = vcmp.eq.s32.totalorder %v48, %v66
    %vm82 = vcmp.eq.s32.totalorder %v48, %v69
    %vm83 = vcmp.eq.s32.totalorder %v48, %v72
    %vm84 = vcmp.eq.s32.totalorder %v48, %v75
    %v85 = vsel %vm76, 1, 0
    %v86 = vsel %vm77, 1, 0
    %v87 = vsel %vm78, 1, 0
    %v88 = vsel %vm79, 1, 0
    %v89 = vsel %vm80, 1, 0
    %v90 = vsel %vm81, 1, 0
    %v91 = vsel %vm82, 1, 0
    %v92 = vsel %vm83, 1, 0
    %v93 = vsel %vm84, 1, 0
    %v94 = vcvt.s32.f32 %v85
    %v95 = vcvt.s32.f32 %v86
    %v96 = vcvt.s32.f32 %v87
    %v97 = vcvt.s32.f32 %v88
    %v98 = vcvt.s32.f32 %v89
    %v99 = vcvt.s32.f32 %v90
    %v100 = vcvt.s32.f32 %v91
    %v101 = vcvt.s32.f32 %v92
    %v102 = vcvt.s32.f32 %v93
    %vm103 = vcmask 523264
    %v105 = vsel %vm103, %v94, 0
    %v108 = vsel %vm103, %v95, 0
    %v111 = vsel %vm103, %v96, 0
    %v114 = vsel %vm103, %v97, 0
    %v117 = vsel %vm103, %v98, 0
    %v120 = vsel %vm103, %v99, 0
    %v123 = vsel %vm103, %v100, 0
    %v126 = vsel %vm103, %v101, 0
    %v129 = vsel %vm103, %v102, 0
    %131 = vmatprep.subr.mxu0 0.0
    %132 = vmatpush1.msra.mxu0 %v18
    %133 = vmatprep.subr.mxu0 0.0
    %134 = vmatpush1.msra.mxu0 %v19
    %135 = vmatprep.subr.mxu0 0.0
    %136 = vmatpush1.msra.mxu0 %v20
    %137 = vmatprep.subr.mxu0 0.0
    %138 = vmatpush1.msra.mxu0 %v21
    %139 = vmatprep.subr.mxu0 0.0
    %140 = vmatpush1.msra.mxu0 %v22
    %141 = vmatprep.subr.mxu0 0.0
    %142 = vmatpush1.msra.mxu0 %v23
    %143 = vmatprep.subr.mxu0 0.0
    %144 = vmatpush1.msra.mxu0 %v24
    %145 = vmatprep.subr.mxu0 0.0
    %146 = vmatpush1.msra.mxu0 %v25
    %147 = vmatprep.subr.mxu0 0.0
    %148 = vmatpush1.msra.mxu0 0.0
    %149 = vmatprep.subr.mxu0 0.0
    %150 = vmatpush1.msra.mxu0 0.0
    %151 = vmatprep.subr.mxu0 0.0
    %152 = vmatpush1.msra.mxu0 0.0
    %153 = vmatprep.subr.mxu0 0.0
    %154 = vmatpush1.msra.mxu0 0.0
    %155 = vmatprep.subr.mxu0 0.0
    %156 = vmatpush1.msra.mxu0 0.0
    %157 = vmatprep.subr.mxu0 0.0
    %158 = vmatpush1.msra.mxu0 0.0
    %159 = vmatprep.subr.mxu0 0.0
    %160 = vmatpush1.msra.mxu0 0.0
    %161 = vmatprep.subr.mxu0 0.0
    %162 = vmatpush1.msra.mxu0 0.0
    %163 = vmatprep.subr.mxu0 0.0
    %164 = vmatpush1.msra.mxu0 0.0
    %165 = vmatprep.subr.mxu0 0.0
    %166 = vmatpush1.msra.mxu0 0.0
    %167 = vmatprep.subr.mxu0 0.0
    %168 = vmatpush1.msra.mxu0 0.0
    %169 = vmatprep.subr.mxu0 0.0
    %170 = vmatpush1.msra.mxu0 0.0
    %171 = vmatprep.subr.mxu0 0.0
    %172 = vmatpush1.msra.mxu0 0.0
    %173 = vmatprep.subr.mxu0 0.0
    %174 = vmatpush1.msra.mxu0 0.0
    %175 = vmatprep.subr.mxu0 0.0
    %176 = vmatpush1.msra.mxu0 0.0
    %177 = vmatprep.subr.mxu0 0.0
    %178 = vmatpush1.msra.mxu0 0.0
    %179 = vmatprep.subr.mxu0 0.0
    %180 = vmatpush1.msra.mxu0 0.0
    %181 = vmatprep.subr.mxu0 0.0
    %182 = vmatpush1.msra.mxu0 0.0
    %183 = vmatprep.subr.mxu0 0.0
    %184 = vmatpush1.msra.mxu0 0.0
    %185 = vmatprep.subr.mxu0 0.0
    %186 = vmatpush1.msra.mxu0 0.0
    %187 = vmatprep.subr.mxu0 0.0
    %188 = vmatpush1.msra.mxu0 0.0
    %189 = vmatprep.subr.mxu0 0.0
    %190 = vmatpush1.msra.mxu0 0.0
    %191 = vmatprep.subr.mxu0 0.0
    %192 = vmatpush1.msra.mxu0 0.0
    %193 = vmatprep.subr.mxu0 0.0
    %194 = vmatpush1.msra.mxu0 0.0
    %195 = vmatprep.mubr.f32.mxu0 0.0
    %196 = vmatmul.mubr.f32.gmra.mrb[0].mxu0 %v105
    %v197 = vpop.f32.mrb[0].mxu0
    %v198 = vadd.f32 0.0, %v197
    %v199 = vpop.f32.mrb[0].mxu0
    %200 = vmatprep.mubr.f32.mxu0 0.0
    %201 = vmatmul.mubr.f32.gmra.mrb[0].mxu0 %v108
    %v202 = vpop.f32.mrb[0].mxu0
    %v203 = vadd.f32 0.0, %v202
    %v204 = vpop.f32.mrb[0].mxu0
    %205 = vmatprep.mubr.f32.mxu0 0.0
    %206 = vmatmul.mubr.f32.gmra.mrb[0].mxu0 %v111
    %v207 = vpop.f32.mrb[0].mxu0
    %v208 = vadd.f32 0.0, %v207
    %v209 = vpop.f32.mrb[0].mxu0
    %210 = vmatprep.mubr.f32.mxu0 0.0
    %211 = vmatmul.mubr.f32.gmra.mrb[0].mxu0 %v114
    %v212 = vpop.f32.mrb[0].mxu0
    %v213 = vadd.f32 0.0, %v212
    %v214 = vpop.f32.mrb[0].mxu0
    %215 = vmatprep.mubr.f32.mxu0 0.0
    %216 = vmatmul.mubr.f32.gmra.mrb[0].mxu0 %v117
    %v217 = vpop.f32.mrb[0].mxu0
    %v218 = vadd.f32 0.0, %v217
    %v219 = vpop.f32.mrb[0].mxu0
    %220 = vmatprep.mubr.f32.mxu0 0.0
    %221 = vmatmul.mubr.f32.gmra.mrb[0].mxu0 %v120
    %v222 = vpop.f32.mrb[0].mxu0
    %v223 = vadd.f32 0.0, %v222
    %v224 = vpop.f32.mrb[0].mxu0
    %225 = vmatprep.mubr.f32.mxu0 0.0
    %226 = vmatmul.mubr.f32.gmra.mrb[0].mxu0 %v123
    %v227 = vpop.f32.mrb[0].mxu0
    %v228 = vadd.f32 0.0, %v227
    %v229 = vpop.f32.mrb[0].mxu0
    %230 = vmatprep.mubr.f32.mxu0 0.0
    %231 = vmatmul.mubr.f32.gmra.mrb[0].mxu0 %v126
    %v232 = vpop.f32.mrb[0].mxu0
    %v233 = vadd.f32 0.0, %v232
    %v234 = vpop.f32.mrb[0].mxu0
    %235 = vmatprep.mubr.f32.mxu0 0.0
    %236 = vmatmul.mubr.f32.gmra.mrb[0].mxu0 %v129
    %v237 = vpop.f32.mrb[0].mxu0
    %v238 = vadd.f32 0.0, %v237
    %v239 = vpop.f32.mrb[0].mxu0
    %240 = vdwg.mxu0
    %241 = vset.pattern.permute.xlu0 0
    %242 = vperm.xlu0 %241, %v41
    %v243 = vpop.permute.xlu0 %242
    %244 = vset.pattern.permute.xlu0 0
    %245 = vperm.xlu0 %244, %v42
    %v246 = vpop.permute.xlu0 %245
    %247 = vset.pattern.permute.xlu0 0
    %248 = vperm.xlu0 %247, %v43
    %v249 = vpop.permute.xlu0 %248
    %250 = vset.pattern.permute.xlu0 0
    %251 = vperm.xlu0 %250, %v44
    %v252 = vpop.permute.xlu0 %251
    %vm253 = vcmp.eq.s32.totalorder %v48, %v243
    %vm254 = vcmp.eq.s32.totalorder %v48, %v246
    %vm255 = vcmp.eq.s32.totalorder %v48, %v249
    %vm256 = vcmp.eq.s32.totalorder %v48, %v252
    %v257 = vsel %vm253, 1, 0
    %v258 = vsel %vm254, 1, 0
    %v259 = vsel %vm255, 1, 0
    %v260 = vsel %vm256, 1, 0
    %v261 = vcvt.s32.f32 %v257
    %v262 = vcvt.s32.f32 %v258
    %v263 = vcvt.s32.f32 %v259
    %v264 = vcvt.s32.f32 %v260
    %vm265 = vcmask 130048
    %v267 = vsel %vm265, %v261, 0
    %v270 = vsel %vm265, %v262, 0
    %v273 = vsel %vm265, %v263, 0
    %v276 = vsel %vm265, %v264, 0
    %278 = vmatprep.subr.mxu0 %v27
    %279 = vmatpush1.msra.mxu0 %v26
    %280 = vmatprep.subr.mxu0 %v29
    %281 = vmatpush1.msra.mxu0 %v28
    %282 = vmatprep.subr.mxu0 0.0
    %283 = vmatpush1.msra.mxu0 0.0
    %284 = vmatprep.subr.mxu0 0.0
    %285 = vmatpush1.msra.mxu0 0.0
    %286 = vmatprep.subr.mxu0 0.0
    %287 = vmatpush1.msra.mxu0 0.0
    %288 = vmatprep.subr.mxu0 0.0
    %289 = vmatpush1.msra.mxu0 0.0
    %290 = vmatprep.subr.mxu0 0.0
    %291 = vmatpush1.msra.mxu0 0.0
    %292 = vmatprep.subr.mxu0 0.0
    %293 = vmatpush1.msra.mxu0 0.0
    %294 = vmatprep.subr.mxu0 0.0
    %295 = vmatpush1.msra.mxu0 0.0
    %296 = vmatprep.subr.mxu0 0.0
    %297 = vmatpush1.msra.mxu0 0.0
    %298 = vmatprep.subr.mxu0 0.0
    %299 = vmatpush1.msra.mxu0 0.0
    %300 = vmatprep.subr.mxu0 0.0
    %301 = vmatpush1.msra.mxu0 0.0
    %302 = vmatprep.subr.mxu0 0.0
    %303 = vmatpush1.msra.mxu0 0.0
    %304 = vmatprep.subr.mxu0 0.0
    %305 = vmatpush1.msra.mxu0 0.0
    %306 = vmatprep.subr.mxu0 0.0
    %307 = vmatpush1.msra.mxu0 0.0
    %308 = vmatprep.subr.mxu0 0.0
    %309 = vmatpush1.msra.mxu0 0.0
    %310 = vmatprep.subr.mxu0 0.0
    %311 = vmatpush1.msra.mxu0 0.0
    %312 = vmatprep.subr.mxu0 0.0
    %313 = vmatpush1.msra.mxu0 0.0
    %314 = vmatprep.subr.mxu0 0.0
    %315 = vmatpush1.msra.mxu0 0.0
    %316 = vmatprep.subr.mxu0 0.0
    %317 = vmatpush1.msra.mxu0 0.0
    %318 = vmatprep.subr.mxu0 0.0
    %319 = vmatpush1.msra.mxu0 0.0
    %320 = vmatprep.subr.mxu0 0.0
    %321 = vmatpush1.msra.mxu0 0.0
    %322 = vmatprep.subr.mxu0 0.0
    %323 = vmatpush1.msra.mxu0 0.0
    %324 = vmatprep.subr.mxu0 0.0
    %325 = vmatpush1.msra.mxu0 0.0
    %326 = vmatprep.subr.mxu0 0.0
    %327 = vmatpush1.msra.mxu0 0.0
    %328 = vmatprep.subr.mxu0 0.0
    %329 = vmatpush1.msra.mxu0 0.0
    %330 = vmatprep.subr.mxu0 0.0
    %331 = vmatpush1.msra.mxu0 0.0
    %332 = vmatprep.subr.mxu0 0.0
    %333 = vmatpush1.msra.mxu0 0.0
    %334 = vmatprep.subr.mxu0 0.0
    %335 = vmatpush1.msra.mxu0 0.0
    %336 = vmatprep.subr.mxu0 0.0
    %337 = vmatpush1.msra.mxu0 0.0
    %338 = vmatprep.subr.mxu0 0.0
    %339 = vmatpush1.msra.mxu0 0.0
    %340 = vmatprep.subr.mxu0 0.0
    %341 = vmatpush1.msra.mxu0 0.0
    %342 = vmatprep.mubr.f32.mxu0 0.0
    %343 = vmatmul.mubr.f32.gmra.mrb[0].mxu0 %v267
    %v344 = vpop.f32.mrb[0].mxu0
    %v345 = vadd.f32 0.0, %v344
    %v346 = vpop.f32.mrb[0].mxu0
    %v347 = vadd.f32 0.0, %v346
    %348 = vmatprep.mubr.f32.mxu0 0.0
    %349 = vmatmul.mubr.f32.gmra.mrb[0].mxu0 %v270
    %v350 = vpop.f32.mrb[0].mxu0
    %v351 = vadd.f32 0.0, %v350
    %v352 = vpop.f32.mrb[0].mxu0
    %v353 = vadd.f32 0.0, %v352
    %354 = vmatprep.mubr.f32.mxu0 0.0
    %355 = vmatmul.mubr.f32.gmra.mrb[0].mxu0 %v273
    %v356 = vpop.f32.mrb[0].mxu0
    %v357 = vadd.f32 0.0, %v356
    %v358 = vpop.f32.mrb[0].mxu0
    %v359 = vadd.f32 0.0, %v358
    %360 = vmatprep.mubr.f32.mxu0 0.0
    %361 = vmatmul.mubr.f32.gmra.mrb[0].mxu0 %v276
    %v362 = vpop.f32.mrb[0].mxu0
    %v363 = vadd.f32 0.0, %v362
    %v364 = vpop.f32.mrb[0].mxu0
    %v365 = vadd.f32 0.0, %v364
    %366 = vdwg.mxu0
    %v367 = vlaneseq
    %v368 = vshrl.u32 %v367, 7
    %v369 = vadd.s32 %v368, 8
    %v370 = vadd.s32 %v48, 128
    %v371 = vshra.s32 %v48, 4
    %v372 = vshra.s32 %v370, 4
    %vm373 = vcmp.eq.s32.totalorder %v371, %v368
    %vm374 = vcmp.eq.s32.totalorder %v372, %v368
    %vm375 = vcmp.eq.s32.totalorder %v371, %v369
    %vm376 = vcmp.eq.s32.totalorder %v372, %v369
    %v377 = vsel %vm373, 1, 0
    %v378 = vsel %vm374, 1, 0
    %v379 = vsel %vm375, 1, 0
    %v380 = vsel %vm376, 1, 0
    %v381 = vcvt.s32.f32 %v377
    %v382 = vcvt.s32.f32 %v378
    %v383 = vcvt.s32.f32 %v379
    %v384 = vcvt.s32.f32 %v380
    %v385 = vand.u32 %v48, 15
    %v386 = vand.u32 %v370, 15
    %vm387 = vcmp.eq.s32.totalorder %v385, %v368
    %vm388 = vcmp.eq.s32.totalorder %v386, %v368
    %vm389 = vcmp.eq.s32.totalorder %v385, %v369
    %vm390 = vcmp.eq.s32.totalorder %v386, %v369
    %v391 = vsel %vm387, 1, 0
    %v392 = vsel %vm388, 1, 0
    %v393 = vsel %vm389, 1, 0
    %v394 = vsel %vm390, 1, 0
    %v395 = vcvt.s32.f32 %v391
    %v396 = vcvt.s32.f32 %v392
    %v397 = vcvt.s32.f32 %v393
    %v398 = vcvt.s32.f32 %v394
    %v400 = vsel %vm265, %v198, 0
    %v403 = vsel %vm265, %v203, 0
    %v406 = vsel %vm265, %v208, 0
    %v409 = vsel %vm265, %v213, 0
    %v412 = vsel %vm265, %v218, 0
    %v415 = vsel %vm265, %v223, 0
    %v418 = vsel %vm265, %v228, 0
    %v421 = vsel %vm265, %v233, 0
    %423 = vmatprep.subr.mxu0 %v396
    %424 = vmatpush1.msra.mxu0 %v395
    %425 = vmatprep.subr.mxu0 %v398
    %426 = vmatpush1.msra.mxu0 %v397
    %427 = vmatprep.subr.mxu0 0.0
    %428 = vmatpush1.msra.mxu0 0.0
    %429 = vmatprep.subr.mxu0 0.0
    %430 = vmatpush1.msra.mxu0 0.0
    %431 = vmatprep.subr.mxu0 0.0
    %432 = vmatpush1.msra.mxu0 0.0
    %433 = vmatprep.subr.mxu0 0.0
    %434 = vmatpush1.msra.mxu0 0.0
    %435 = vmatprep.subr.mxu0 0.0
    %436 = vmatpush1.msra.mxu0 0.0
    %437 = vmatprep.subr.mxu0 0.0
    %438 = vmatpush1.msra.mxu0 0.0
    %439 = vmatprep.subr.mxu0 0.0
    %440 = vmatpush1.msra.mxu0 0.0
    %441 = vmatprep.subr.mxu0 0.0
    %442 = vmatpush1.msra.mxu0 0.0
    %443 = vmatprep.subr.mxu0 0.0
    %444 = vmatpush1.msra.mxu0 0.0
    %445 = vmatprep.subr.mxu0 0.0
    %446 = vmatpush1.msra.mxu0 0.0
    %447 = vmatprep.subr.mxu0 0.0
    %448 = vmatpush1.msra.mxu0 0.0
    %449 = vmatprep.subr.mxu0 0.0
    %450 = vmatpush1.msra.mxu0 0.0
    %451 = vmatprep.subr.mxu0 0.0
    %452 = vmatpush1.msra.mxu0 0.0
    %453 = vmatprep.subr.mxu0 0.0
    %454 = vmatpush1.msra.mxu0 0.0
    %455 = vmatprep.subr.mxu0 0.0
    %456 = vmatpush1.msra.mxu0 0.0
    %457 = vmatprep.subr.mxu0 0.0
    %458 = vmatpush1.msra.mxu0 0.0
    %459 = vmatprep.subr.mxu0 0.0
    %460 = vmatpush1.msra.mxu0 0.0
    %461 = vmatprep.subr.mxu0 0.0
    %462 = vmatpush1.msra.mxu0 0.0
    %463 = vmatprep.subr.mxu0 0.0
    %464 = vmatpush1.msra.mxu0 0.0
    %465 = vmatprep.subr.mxu0 0.0
    %466 = vmatpush1.msra.mxu0 0.0
    %467 = vmatprep.subr.mxu0 0.0
    %468 = vmatpush1.msra.mxu0 0.0
    %469 = vmatprep.subr.mxu0 0.0
    %470 = vmatpush1.msra.mxu0 0.0
    %471 = vmatprep.subr.mxu0 0.0
    %472 = vmatpush1.msra.mxu0 0.0
    %473 = vmatprep.subr.mxu0 0.0
    %474 = vmatpush1.msra.mxu0 0.0
    %475 = vmatprep.subr.mxu0 0.0
    %476 = vmatpush1.msra.mxu0 0.0
    %477 = vmatprep.subr.mxu0 0.0
    %478 = vmatpush1.msra.mxu0 0.0
    %479 = vmatprep.subr.mxu0 0.0
    %480 = vmatpush1.msra.mxu0 0.0
    %481 = vmatprep.subr.mxu0 0.0
    %482 = vmatpush1.msra.mxu0 0.0
    %483 = vmatprep.subr.mxu0 0.0
    %484 = vmatpush1.msra.mxu0 0.0
    %485 = vmatprep.subr.mxu0 0.0
    %486 = vmatpush1.msra.mxu0 0.0
    %487 = vmatprep.mubr.f32.mxu0 0.0
    %488 = vmatmul.mubr.f32.gmra.mrb[0].mxu0 %v400
    %v489 = vpop.f32.mrb[0].mxu0
    %v490 = vadd.f32 0.0, %v489
    %v491 = vpop.f32.mrb[0].mxu0
    %v492 = vadd.f32 0.0, %v491
    %493 = vmatprep.mubr.f32.mxu0 0.0
    %494 = vmatmul.mubr.f32.gmra.mrb[0].mxu0 %v403
    %v495 = vpop.f32.mrb[0].mxu0
    %v496 = vadd.f32 0.0, %v495
    %v497 = vpop.f32.mrb[0].mxu0
    %v498 = vadd.f32 0.0, %v497
    %499 = vmatprep.mubr.f32.mxu0 0.0
    %500 = vmatmul.mubr.f32.gmra.mrb[0].mxu0 %v406
    %v501 = vpop.f32.mrb[0].mxu0
    %v502 = vadd.f32 0.0, %v501
    %v503 = vpop.f32.mrb[0].mxu0
    %v504 = vadd.f32 0.0, %v503
    %505 = vmatprep.mubr.f32.mxu0 0.0
    %506 = vmatmul.mubr.f32.gmra.mrb[0].mxu0 %v409
    %v507 = vpop.f32.mrb[0].mxu0
    %v508 = vadd.f32 0.0, %v507
    %v509 = vpop.f32.mrb[0].mxu0
    %v510 = vadd.f32 0.0, %v509
    %511 = vmatprep.mubr.f32.mxu0 0.0
    %512 = vmatmul.mubr.f32.gmra.mrb[0].mxu0 %v412
    %v513 = vpop.f32.mrb[0].mxu0
    %v514 = vadd.f32 0.0, %v513
    %v515 = vpop.f32.mrb[0].mxu0
    %v516 = vadd.f32 0.0, %v515
    %517 = vmatprep.mubr.f32.mxu0 0.0
    %518 = vmatmul.mubr.f32.gmra.mrb[0].mxu0 %v415
    %v519 = vpop.f32.mrb[0].mxu0
    %v520 = vadd.f32 0.0, %v519
    %v521 = vpop.f32.mrb[0].mxu0
    %v522 = vadd.f32 0.0, %v521
    %523 = vmatprep.mubr.f32.mxu0 0.0
    %524 = vmatmul.mubr.f32.gmra.mrb[0].mxu0 %v418
    %v525 = vpop.f32.mrb[0].mxu0
    %v526 = vadd.f32 0.0, %v525
    %v527 = vpop.f32.mrb[0].mxu0
    %v528 = vadd.f32 0.0, %v527
    %529 = vmatprep.mubr.f32.mxu0 0.0
    %530 = vmatmul.mubr.f32.gmra.mrb[0].mxu0 %v421
    %v531 = vpop.f32.mrb[0].mxu0
    %v532 = vadd.f32 0.0, %v531
    %v533 = vpop.f32.mrb[0].mxu0
    %v534 = vadd.f32 0.0, %v533
    %535 = vdwg.mxu0
    %536 = vmatprep.subr.mxu0 %v382
    %537 = vmatpush1.msra.mxu0 %v381
    %538 = vmatprep.subr.mxu0 %v384
    %539 = vmatpush1.msra.mxu0 %v383
    %540 = vmatprep.subr.mxu0 0.0
    %541 = vmatpush1.msra.mxu0 0.0
    %542 = vmatprep.subr.mxu0 0.0
    %543 = vmatpush1.msra.mxu0 0.0
    %544 = vmatprep.subr.mxu0 0.0
    %545 = vmatpush1.msra.mxu0 0.0
    %546 = vmatprep.subr.mxu0 0.0
    %547 = vmatpush1.msra.mxu0 0.0
    %548 = vmatprep.subr.mxu0 0.0
    %549 = vmatpush1.msra.mxu0 0.0
    %550 = vmatprep.subr.mxu0 0.0
    %551 = vmatpush1.msra.mxu0 0.0
    %552 = vmatprep.subr.mxu0 0.0
    %553 = vmatpush1.msra.mxu0 0.0
    %554 = vmatprep.subr.mxu0 0.0
    %555 = vmatpush1.msra.mxu0 0.0
    %556 = vmatprep.subr.mxu0 0.0
    %557 = vmatpush1.msra.mxu0 0.0
    %558 = vmatprep.subr.mxu0 0.0
    %559 = vmatpush1.msra.mxu0 0.0
    %560 = vmatprep.subr.mxu0 0.0
    %561 = vmatpush1.msra.mxu0 0.0
    %562 = vmatprep.subr.mxu0 0.0
    %563 = vmatpush1.msra.mxu0 0.0
    %564 = vmatprep.subr.mxu0 0.0
    %565 = vmatpush1.msra.mxu0 0.0
    %566 = vmatprep.subr.mxu0 0.0
    %567 = vmatpush1.msra.mxu0 0.0
    %568 = vmatprep.subr.mxu0 0.0
    %569 = vmatpush1.msra.mxu0 0.0
    %570 = vmatprep.subr.mxu0 0.0
    %571 = vmatpush1.msra.mxu0 0.0
    %572 = vmatprep.subr.mxu0 0.0
    %573 = vmatpush1.msra.mxu0 0.0
    %574 = vmatprep.subr.mxu0 0.0
    %575 = vmatpush1.msra.mxu0 0.0
    %576 = vmatprep.subr.mxu0 0.0
    %577 = vmatpush1.msra.mxu0 0.0
    %578 = vmatprep.subr.mxu0 0.0
    %579 = vmatpush1.msra.mxu0 0.0
    %580 = vmatprep.subr.mxu0 0.0
    %581 = vmatpush1.msra.mxu0 0.0
    %582 = vmatprep.subr.mxu0 0.0
    %583 = vmatpush1.msra.mxu0 0.0
    %584 = vmatprep.subr.mxu0 0.0
    %585 = vmatpush1.msra.mxu0 0.0
    %586 = vmatprep.subr.mxu0 0.0
    %587 = vmatpush1.msra.mxu0 0.0
    %588 = vmatprep.subr.mxu0 0.0
    %589 = vmatpush1.msra.mxu0 0.0
    %590 = vmatprep.subr.mxu0 0.0
    %591 = vmatpush1.msra.mxu0 0.0
    %592 = vmatprep.subr.mxu0 0.0
    %593 = vmatpush1.msra.mxu0 0.0
    %594 = vmatprep.subr.mxu0 0.0
    %595 = vmatpush1.msra.mxu0 0.0
    %596 = vmatprep.subr.mxu0 0.0
    %597 = vmatpush1.msra.mxu0 0.0
    %598 = vmatprep.subr.mxu0 0.0
    %599 = vmatpush1.msra.mxu0 0.0
    %600 = vmatprep.mubr.f32.mxu0 0.0
    %601 = vmatmul.mubr.f32.gmra.mrb[0].mxu0 %v400
    %v602 = vpop.f32.mrb[0].mxu0
    %v603 = vadd.f32 0.0, %v602
    %v604 = vpop.f32.mrb[0].mxu0
    %v605 = vadd.f32 0.0, %v604
    %606 = vmatprep.mubr.f32.mxu0 0.0
    %607 = vmatmul.mubr.f32.gmra.mrb[0].mxu0 %v403
    %v608 = vpop.f32.mrb[0].mxu0
    %v609 = vadd.f32 0.0, %v608
    %v610 = vpop.f32.mrb[0].mxu0
    %v611 = vadd.f32 0.0, %v610
    %612 = vmatprep.mubr.f32.mxu0 0.0
    %613 = vmatmul.mubr.f32.gmra.mrb[0].mxu0 %v406
    %v614 = vpop.f32.mrb[0].mxu0
    %v615 = vadd.f32 0.0, %v614
    %v616 = vpop.f32.mrb[0].mxu0
    %v617 = vadd.f32 0.0, %v616
    %618 = vmatprep.mubr.f32.mxu0 0.0
    %619 = vmatmul.mubr.f32.gmra.mrb[0].mxu0 %v409
    %v620 = vpop.f32.mrb[0].mxu0
    %v621 = vadd.f32 0.0, %v620
    %v622 = vpop.f32.mrb[0].mxu0
    %v623 = vadd.f32 0.0, %v622
    %624 = vdwg.mxu0
    %v625 = vmul.f32 %v198, %v198
    %v626 = vmul.f32 %v203, %v203
    %v627 = vmul.f32 %v208, %v208
    %v628 = vmul.f32 %v213, %v213
    %v629 = vmul.f32 %v218, %v218
    %v630 = vmul.f32 %v223, %v223
    %v631 = vmul.f32 %v228, %v228
    %v632 = vmul.f32 %v233, %v233
    %v633 = vsel %vm265, %v625, 0.0
    %634 = vadd.xlane.f32.xlu0 %v633
    %v635 = vpop.xlane.xlu0 %634
    %v636 = vsel %vm265, %v626, 0.0
    %637 = vadd.xlane.f32.xlu0 %v636
    %v638 = vpop.xlane.xlu0 %637
    %v639 = vsel %vm265, %v627, 0.0
    %640 = vadd.xlane.f32.xlu0 %v639
    %v641 = vpop.xlane.xlu0 %640
    %v642 = vsel %vm265, %v628, 0.0
    %643 = vadd.xlane.f32.xlu0 %v642
    %v644 = vpop.xlane.xlu0 %643
    %v645 = vsel %vm265, %v629, 0.0
    %646 = vadd.xlane.f32.xlu0 %v645
    %v647 = vpop.xlane.xlu0 %646
    %v648 = vsel %vm265, %v630, 0.0
    %649 = vadd.xlane.f32.xlu0 %v648
    %v650 = vpop.xlane.xlu0 %649
    %v651 = vsel %vm265, %v631, 0.0
    %652 = vadd.xlane.f32.xlu0 %v651
    %v653 = vpop.xlane.xlu0 %652
    %v654 = vsel %vm265, %v632, 0.0
    %655 = vadd.xlane.f32.xlu0 %v654
    %v656 = vpop.xlane.xlu0 %655
    %v657 = vadd.f32 %v635, %v638
    %v658 = vadd.f32 %v657, %v641
    %v659 = vadd.f32 %v658, %v644
    %v660 = vadd.f32 %v659, %v647
    %v661 = vadd.f32 %v660, %v650
    %v662 = vadd.f32 %v661, %v653
    %v663 = vadd.f32 %v662, %v656
    %v664 = vrot.slane %v663, 4
    %v665 = vadd.f32 %v663, %v664
    %v666 = vrot.slane %v665, 2
    %v667 = vadd.f32 %v665, %v666
    %v668 = vrot.slane %v667, 1
    %v669 = vadd.f32 %v667, %v668
    %v670 = vmul.f32 %v345, %v345
    %v671 = vmul.f32 %v347, %v347
    %v672 = vmul.f32 %v351, %v351
    %v673 = vmul.f32 %v353, %v353
    %v674 = vmul.f32 %v357, %v357
    %v675 = vmul.f32 %v359, %v359
    %v676 = vmul.f32 %v363, %v363
    %v677 = vmul.f32 %v365, %v365
    %v678 = vadd.f32 %v670, %v671
    %679 = vadd.xlane.f32.xlu0 %v678
    %v680 = vpop.xlane.xlu0 %679
    %v681 = vadd.f32 %v672, %v673
    %682 = vadd.xlane.f32.xlu0 %v681
    %v683 = vpop.xlane.xlu0 %682
    %v684 = vadd.f32 %v674, %v675
    %685 = vadd.xlane.f32.xlu0 %v684
    %v686 = vpop.xlane.xlu0 %685
    %v687 = vadd.f32 %v676, %v677
    %688 = vadd.xlane.f32.xlu0 %v687
    %v689 = vpop.xlane.xlu0 %688
    %v690 = vadd.f32 %v680, %v683
    %v691 = vadd.f32 %v690, %v686
    %v692 = vadd.f32 %v691, %v689
    %v693 = vrot.slane %v692, 4
    %v694 = vadd.f32 %v692, %v693
    %v695 = vrot.slane %v694, 2
    %v696 = vadd.f32 %v694, %v695
    %v697 = vrot.slane %v696, 1
    %v698 = vadd.f32 %v696, %v697
    %v699 = vadd.f32 %v669, %v698
    %v701 = vsel %vm265, %v238, 0
    %703 = vmatprep.subr.mxu0 %v382
    %704 = vmatpush1.msra.mxu0 %v381
    %705 = vmatprep.subr.mxu0 %v384
    %706 = vmatpush1.msra.mxu0 %v383
    %707 = vmatprep.subr.mxu0 0.0
    %708 = vmatpush1.msra.mxu0 0.0
    %709 = vmatprep.subr.mxu0 0.0
    %710 = vmatpush1.msra.mxu0 0.0
    %711 = vmatprep.subr.mxu0 0.0
    %712 = vmatpush1.msra.mxu0 0.0
    %713 = vmatprep.subr.mxu0 0.0
    %714 = vmatpush1.msra.mxu0 0.0
    %715 = vmatprep.subr.mxu0 0.0
    %716 = vmatpush1.msra.mxu0 0.0
    %717 = vmatprep.subr.mxu0 0.0
    %718 = vmatpush1.msra.mxu0 0.0
    %719 = vmatprep.subr.mxu0 0.0
    %720 = vmatpush1.msra.mxu0 0.0
    %721 = vmatprep.subr.mxu0 0.0
    %722 = vmatpush1.msra.mxu0 0.0
    %723 = vmatprep.subr.mxu0 0.0
    %724 = vmatpush1.msra.mxu0 0.0
    %725 = vmatprep.subr.mxu0 0.0
    %726 = vmatpush1.msra.mxu0 0.0
    %727 = vmatprep.subr.mxu0 0.0
    %728 = vmatpush1.msra.mxu0 0.0
    %729 = vmatprep.subr.mxu0 0.0
    %730 = vmatpush1.msra.mxu0 0.0
    %731 = vmatprep.subr.mxu0 0.0
    %732 = vmatpush1.msra.mxu0 0.0
    %733 = vmatprep.subr.mxu0 0.0
    %734 = vmatpush1.msra.mxu0 0.0
    %735 = vmatprep.subr.mxu0 0.0
    %736 = vmatpush1.msra.mxu0 0.0
    %737 = vmatprep.subr.mxu0 0.0
    %738 = vmatpush1.msra.mxu0 0.0
    %739 = vmatprep.subr.mxu0 0.0
    %740 = vmatpush1.msra.mxu0 0.0
    %741 = vmatprep.subr.mxu0 0.0
    %742 = vmatpush1.msra.mxu0 0.0
    %743 = vmatprep.subr.mxu0 0.0
    %744 = vmatpush1.msra.mxu0 0.0
    %745 = vmatprep.subr.mxu0 0.0
    %746 = vmatpush1.msra.mxu0 0.0
    %747 = vmatprep.subr.mxu0 0.0
    %748 = vmatpush1.msra.mxu0 0.0
    %749 = vmatprep.subr.mxu0 0.0
    %750 = vmatpush1.msra.mxu0 0.0
    %751 = vmatprep.subr.mxu0 0.0
    %752 = vmatpush1.msra.mxu0 0.0
    %753 = vmatprep.subr.mxu0 0.0
    %754 = vmatpush1.msra.mxu0 0.0
    %755 = vmatprep.subr.mxu0 0.0
    %756 = vmatpush1.msra.mxu0 0.0
    %757 = vmatprep.subr.mxu0 0.0
    %758 = vmatpush1.msra.mxu0 0.0
    %759 = vmatprep.subr.mxu0 0.0
    %760 = vmatpush1.msra.mxu0 0.0
    %761 = vmatprep.subr.mxu0 0.0
    %762 = vmatpush1.msra.mxu0 0.0
    %763 = vmatprep.subr.mxu0 0.0
    %764 = vmatpush1.msra.mxu0 0.0
    %765 = vmatprep.subr.mxu0 0.0
    %766 = vmatpush1.msra.mxu0 0.0
    %767 = vmatprep.mubr.f32.mxu0 0.0
    %768 = vmatmul.mubr.f32.gmra.mrb[0].mxu0 %v701
    %v769 = vpop.f32.mrb[0].mxu0
    %v770 = vadd.f32 0.0, %v769
    %v771 = vpop.f32.mrb[0].mxu0
    %v772 = vadd.f32 0.0, %v771
    %773 = vdwg.mxu0
    %v774 = vmul.f32 %v345, %v490
    %v775 = vmul.f32 %v347, %v492
    %v776 = vmul.f32 %v351, %v496
    %v777 = vmul.f32 %v353, %v498
    %v780 = vcombine.low %v770, %v772
    %v782 = vunpack.c.l.s4 1966171168
    %v783 = vunpack.c.0.s8 %v782
    %v784 = vlaneseq
    %v785 = vshrl.u32 %v784, 7
    %v786 = vsub.s32 %v783, %v785
    %v787 = vrot.slane %v780, %v786
    %v788 = vcombine.high %v787, %v787
    %v790 = vunpack.c.l.s4 1966171168
    %v791 = vunpack.c.0.s8 %v790
    %v792 = vlaneseq
    %v793 = vshrl.u32 %v792, 7
    %v794 = vsub.s32 %v791, %v793
    %v795 = vrot.slane %v787, %v794
    %v797 = vunpack.c.l.s4 1966171168
    %v798 = vunpack.c.0.s8 %v797
    %v799 = vlaneseq
    %v800 = vshrl.u32 %v799, 7
    %v801 = vsub.s32 %v798, %v800
    %v802 = vrot.slane %v788, %v801
    %v803 = vlaneseq
    %v804 = vshrl.u32 %v803, 7
    %v805 = vsub.s32 0, %v804
    %v806 = vrot.slane %v795, %v805
    %v807 = vlaneseq
    %v808 = vshrl.u32 %v807, 7
    %v809 = vsub.s32 1, %v808
    %v810 = vrot.slane %v795, %v809
    %v811 = vlaneseq
    %v812 = vshrl.u32 %v811, 7
    %v813 = vsub.s32 0, %v812
    %v814 = vrot.slane %v802, %v813
    %v815 = vlaneseq
    %v816 = vshrl.u32 %v815, 7
    %v817 = vsub.s32 1, %v816
    %v818 = vrot.slane %v802, %v817
    %v823 = vmul.f32 %v774, %v806
    %v824 = vmul.f32 %v775, %v810
    %v825 = vmul.f32 %v776, %v814
    %v826 = vmul.f32 %v777, %v818
    %v827 = vadd.f32 %v823, %v824
    %828 = vadd.xlane.f32.xlu0 %v827
    %v829 = vpop.xlane.xlu0 %828
    %v830 = vadd.f32 %v825, %v826
    %831 = vadd.xlane.f32.xlu0 %v830
    %v832 = vpop.xlane.xlu0 %831
    %v833 = vmul.f32 %v345, %v603
    %v834 = vmul.f32 %v347, %v605
    %v835 = vmul.f32 %v351, %v609
    %v836 = vmul.f32 %v353, %v611
    %v837 = vmul.f32 %v833, %v514
    %v838 = vmul.f32 %v834, %v516
    %v839 = vmul.f32 %v835, %v520
    %v840 = vmul.f32 %v836, %v522
    %v841 = vadd.f32 %v837, %v838
    %842 = vadd.xlane.f32.xlu0 %v841
    %v843 = vpop.xlane.xlu0 %842
    %v844 = vadd.f32 %v839, %v840
    %845 = vadd.xlane.f32.xlu0 %v844
    %v846 = vpop.xlane.xlu0 %845
    %v849 = vlaneseq
    %v850 = vshrl.u32 %v849, 7
    %v851 = vsub.s32 %v48, %v850
    %v852 = vrot.slane %v829, %v851
    %v853 = vlaneseq
    %v854 = vshrl.u32 %v853, 7
    %v855 = vsub.s32 %v48, %v854
    %v856 = vrot.slane %v832, %v855
    %vm857 = vcmask 1041409
    %v858 = vsel %vm857, %v856, %v852
    %vm860 = vcmask 58368
    %v861 = vsel %vm860, %v858, -inf
    %862 = vmax.xlane.f32.xlu0 %v861
    %v863 = vpop.xlane.xlu0 %862
    %v865 = vlaneseq
    %v866 = vshrl.u32 %v865, 7
    %v867 = vsub.s32 0, %v866
    %v868 = vrot.slane %v863, %v867
    %v869 = vlaneseq
    %v870 = vshrl.u32 %v869, 7
    %v871 = vsub.s32 1, %v870
    %v872 = vrot.slane %v863, %v871
    %v875 = vsub.f32 %v829, %v868
    %v876 = vsub.f32 %v832, %v872
    %v877 = vmul.f32 %v875, 1.442695
    %v878 = vpow.pop %v877
    %v879 = vmul.f32 %v876, 1.442695
    %v880 = vpow.pop %v879
    %883 = vset.pattern.permute.xlu0 0
    %884 = vperm.xlu0 %883, %v878
    %v885 = vpop.permute.xlu0 %884
    %886 = vset.pattern.permute.xlu0 0
    %887 = vperm.xlu0 %886, %v880
    %v888 = vpop.permute.xlu0 %887
    %v889 = vlaneseq
    %v890 = vshrl.u32 %v889, 7
    %v891 = vsub.s32 %v48, %v890
    %v892 = vrot.slane %v885, %v891
    %v893 = vlaneseq
    %v894 = vshrl.u32 %v893, 7
    %v895 = vsub.s32 %v48, %v894
    %v896 = vrot.slane %v888, %v895
    %v897 = vsel %vm857, %v896, %v892
    %v899 = vsel %vm860, %v897, 0.0
    %900 = vadd.xlane.f32.xlu0 %v899
    %v901 = vpop.xlane.xlu0 %900
    %v902 = vrcp.pop %v901
    %v904 = vlaneseq
    %v905 = vshrl.u32 %v904, 7
    %v906 = vsub.s32 0, %v905
    %v907 = vrot.slane %v902, %v906
    %v908 = vlaneseq
    %v909 = vshrl.u32 %v908, 7
    %v910 = vsub.s32 1, %v909
    %v911 = vrot.slane %v902, %v910
    %v914 = vmul.f32 %v878, %v907
    %v915 = vmul.f32 %v880, %v911
    %917 = vset.pattern.permute.xlu0 0
    %918 = vperm.xlu0 %917, %v914
    %v919 = vpop.permute.xlu0 %918
    %922 = vset.pattern.permute.xlu0 0
    %923 = vperm.xlu0 %922, %v915
    %v924 = vpop.permute.xlu0 %923
    %v926 = vmul.f32 %v218, %v919
    %v927 = vmul.f32 %v223, %v924
    %v928 = vsel %vm265, %v926, 0.0
    %v929 = vrot.slane %v928, 4
    %v930 = vadd.f32 %v928, %v929
    %v931 = vrot.slane %v930, 2
    %v932 = vadd.f32 %v930, %v931
    %v933 = vrot.slane %v932, 1
    %v934 = vadd.f32 %v932, %v933
    %v935 = vsel %vm265, %v927, 0.0
    %v936 = vrot.slane %v935, 4
    %v937 = vadd.f32 %v935, %v936
    %v938 = vrot.slane %v937, 2
    %v939 = vadd.f32 %v937, %v938
    %v940 = vrot.slane %v939, 1
    %v941 = vadd.f32 %v939, %v940
    %v944 = vsel %vm857, %v941, %v934
    %v946 = vadd.f32 %v238, %v944
    %v948 = vsel %vm265, %v946, 0
    %950 = vmatprep.subr.mxu0 0.0
    %951 = vmatpush1.msra.mxu0 %v30
    %952 = vmatprep.subr.mxu0 0.0
    %953 = vmatpush1.msra.mxu0 %v31
    %954 = vmatprep.subr.mxu0 0.0
    %955 = vmatpush1.msra.mxu0 0.0
    %956 = vmatprep.subr.mxu0 0.0
    %957 = vmatpush1.msra.mxu0 0.0
    %958 = vmatprep.subr.mxu0 0.0
    %959 = vmatpush1.msra.mxu0 0.0
    %960 = vmatprep.subr.mxu0 0.0
    %961 = vmatpush1.msra.mxu0 0.0
    %962 = vmatprep.subr.mxu0 0.0
    %963 = vmatpush1.msra.mxu0 0.0
    %964 = vmatprep.subr.mxu0 0.0
    %965 = vmatpush1.msra.mxu0 0.0
    %966 = vmatprep.subr.mxu0 0.0
    %967 = vmatpush1.msra.mxu0 0.0
    %968 = vmatprep.subr.mxu0 0.0
    %969 = vmatpush1.msra.mxu0 0.0
    %970 = vmatprep.subr.mxu0 0.0
    %971 = vmatpush1.msra.mxu0 0.0
    %972 = vmatprep.subr.mxu0 0.0
    %973 = vmatpush1.msra.mxu0 0.0
    %974 = vmatprep.subr.mxu0 0.0
    %975 = vmatpush1.msra.mxu0 0.0
    %976 = vmatprep.subr.mxu0 0.0
    %977 = vmatpush1.msra.mxu0 0.0
    %978 = vmatprep.subr.mxu0 0.0
    %979 = vmatpush1.msra.mxu0 0.0
    %980 = vmatprep.subr.mxu0 0.0
    %981 = vmatpush1.msra.mxu0 0.0
    %982 = vmatprep.subr.mxu0 0.0
    %983 = vmatpush1.msra.mxu0 0.0
    %984 = vmatprep.subr.mxu0 0.0
    %985 = vmatpush1.msra.mxu0 0.0
    %986 = vmatprep.subr.mxu0 0.0
    %987 = vmatpush1.msra.mxu0 0.0
    %988 = vmatprep.subr.mxu0 0.0
    %989 = vmatpush1.msra.mxu0 0.0
    %990 = vmatprep.subr.mxu0 0.0
    %991 = vmatpush1.msra.mxu0 0.0
    %992 = vmatprep.subr.mxu0 0.0
    %993 = vmatpush1.msra.mxu0 0.0
    %994 = vmatprep.subr.mxu0 0.0
    %995 = vmatpush1.msra.mxu0 0.0
    %996 = vmatprep.subr.mxu0 0.0
    %997 = vmatpush1.msra.mxu0 0.0
    %998 = vmatprep.subr.mxu0 0.0
    %999 = vmatpush1.msra.mxu0 0.0
    %1000 = vmatprep.subr.mxu0 0.0
    %1001 = vmatpush1.msra.mxu0 0.0
    %1002 = vmatprep.subr.mxu0 0.0
    %1003 = vmatpush1.msra.mxu0 0.0
    %1004 = vmatprep.subr.mxu0 0.0
    %1005 = vmatpush1.msra.mxu0 0.0
    %1006 = vmatprep.subr.mxu0 0.0
    %1007 = vmatpush1.msra.mxu0 0.0
    %1008 = vmatprep.subr.mxu0 0.0
    %1009 = vmatpush1.msra.mxu0 0.0
    %1010 = vmatprep.subr.mxu0 0.0
    %1011 = vmatpush1.msra.mxu0 0.0
    %1012 = vmatprep.subr.mxu0 0.0
    %1013 = vmatpush1.msra.mxu0 0.0
    %1014 = vmatprep.mubr.f32.mxu0 0.0
    %1015 = vmatmul.mubr.f32.gmra.mrb[0].mxu0 %v948
    %v1016 = vpop.f32.mrb[0].mxu0
    %v1017 = vadd.f32 0.0, %v1016
    %v1018 = vpop.f32.mrb[0].mxu0
    %1019 = vdwg.mxu0
    %v1020 = vadd.f32 %v934, 0.0
    %v1021 = vadd.f32 %v941, 0.0
    %v1022 = vsub.f32 0.0, %v843
    %v1023 = vsub.f32 0.0, %v846
    %v1024 = vmul.f32 %v1022, 1.442695
    %v1025 = vpow.pop %v1024
    %v1026 = vmul.f32 %v1023, 1.442695
    %v1027 = vpow.pop %v1026
    %v1028 = vadd.f32 %v1025, 1.0
    %v1029 = vadd.f32 %v1027, 1.0
    %v1030 = vrcp.pop %v1028
    %v1031 = vrcp.pop %v1029
    %v1034 = vlaneseq
    %v1035 = vshrl.u32 %v1034, 7
    %v1036 = vsub.s32 %v48, %v1035
    %v1037 = vrot.slane %v1030, %v1036
    %v1038 = vlaneseq
    %v1039 = vshrl.u32 %v1038, 7
    %v1040 = vsub.s32 %v48, %v1039
    %v1041 = vrot.slane %v1031, %v1040
    %v1042 = vsel %vm857, %v1041, %v1037
    %v1044 = vsel %vm860, %v1042, 0.0
    %1045 = vadd.xlane.f32.xlu0 %v1044
    %v1046 = vpop.xlane.xlu0 %1045
    %vm1047 = vcmask 1041408
    %v1048 = vsel %vm1047, %v1046, 0.0
    %v1049 = vrot.slane %v1048, 4
    %v1050 = vadd.f32 %v1048, %v1049
    %v1051 = vrot.slane %v1050, 2
    %v1052 = vadd.f32 %v1050, %v1051
    %v1053 = vrot.slane %v1052, 1
    %v1054 = vadd.f32 %v1052, %v1053
    %v1055 = vmul.f32 %v1054, 0.0625
    %v1056 = vadd.f32 %v1055, 0.0
    %v1058 = vsel %vm265, %v1017, 0
    %1060 = vmatprep.subr.mxu0 %v382
    %1061 = vmatpush1.msra.mxu0 %v381
    %1062 = vmatprep.subr.mxu0 %v384
    %1063 = vmatpush1.msra.mxu0 %v383
    %1064 = vmatprep.subr.mxu0 0.0
    %1065 = vmatpush1.msra.mxu0 0.0
    %1066 = vmatprep.subr.mxu0 0.0
    %1067 = vmatpush1.msra.mxu0 0.0
    %1068 = vmatprep.subr.mxu0 0.0
    %1069 = vmatpush1.msra.mxu0 0.0
    %1070 = vmatprep.subr.mxu0 0.0
    %1071 = vmatpush1.msra.mxu0 0.0
    %1072 = vmatprep.subr.mxu0 0.0
    %1073 = vmatpush1.msra.mxu0 0.0
    %1074 = vmatprep.subr.mxu0 0.0
    %1075 = vmatpush1.msra.mxu0 0.0
    %1076 = vmatprep.subr.mxu0 0.0
    %1077 = vmatpush1.msra.mxu0 0.0
    %1078 = vmatprep.subr.mxu0 0.0
    %1079 = vmatpush1.msra.mxu0 0.0
    %1080 = vmatprep.subr.mxu0 0.0
    %1081 = vmatpush1.msra.mxu0 0.0
    %1082 = vmatprep.subr.mxu0 0.0
    %1083 = vmatpush1.msra.mxu0 0.0
    %1084 = vmatprep.subr.mxu0 0.0
    %1085 = vmatpush1.msra.mxu0 0.0
    %1086 = vmatprep.subr.mxu0 0.0
    %1087 = vmatpush1.msra.mxu0 0.0
    %1088 = vmatprep.subr.mxu0 0.0
    %1089 = vmatpush1.msra.mxu0 0.0
    %1090 = vmatprep.subr.mxu0 0.0
    %1091 = vmatpush1.msra.mxu0 0.0
    %1092 = vmatprep.subr.mxu0 0.0
    %1093 = vmatpush1.msra.mxu0 0.0
    %1094 = vmatprep.subr.mxu0 0.0
    %1095 = vmatpush1.msra.mxu0 0.0
    %1096 = vmatprep.subr.mxu0 0.0
    %1097 = vmatpush1.msra.mxu0 0.0
    %1098 = vmatprep.subr.mxu0 0.0
    %1099 = vmatpush1.msra.mxu0 0.0
    %1100 = vmatprep.subr.mxu0 0.0
    %1101 = vmatpush1.msra.mxu0 0.0
    %1102 = vmatprep.subr.mxu0 0.0
    %1103 = vmatpush1.msra.mxu0 0.0
    %1104 = vmatprep.subr.mxu0 0.0
    %1105 = vmatpush1.msra.mxu0 0.0
    %1106 = vmatprep.subr.mxu0 0.0
    %1107 = vmatpush1.msra.mxu0 0.0
    %1108 = vmatprep.subr.mxu0 0.0
    %1109 = vmatpush1.msra.mxu0 0.0
    %1110 = vmatprep.subr.mxu0 0.0
    %1111 = vmatpush1.msra.mxu0 0.0
    %1112 = vmatprep.subr.mxu0 0.0
    %1113 = vmatpush1.msra.mxu0 0.0
    %1114 = vmatprep.subr.mxu0 0.0
    %1115 = vmatpush1.msra.mxu0 0.0
    %1116 = vmatprep.subr.mxu0 0.0
    %1117 = vmatpush1.msra.mxu0 0.0
    %1118 = vmatprep.subr.mxu0 0.0
    %1119 = vmatpush1.msra.mxu0 0.0
    %1120 = vmatprep.subr.mxu0 0.0
    %1121 = vmatpush1.msra.mxu0 0.0
    %1122 = vmatprep.subr.mxu0 0.0
    %1123 = vmatpush1.msra.mxu0 0.0
    %1124 = vmatprep.mubr.f32.mxu0 0.0
    %1125 = vmatmul.mubr.f32.gmra.mrb[0].mxu0 %v1058
    %v1126 = vpop.f32.mrb[0].mxu0
    %v1127 = vadd.f32 0.0, %v1126
    %v1128 = vpop.f32.mrb[0].mxu0
    %v1129 = vadd.f32 0.0, %v1128
    %1130 = vdwg.mxu0
    %v1131 = vmul.f32 %v357, %v502
    %v1132 = vmul.f32 %v359, %v504
    %v1133 = vmul.f32 %v363, %v508
    %v1134 = vmul.f32 %v365, %v510
    %v1137 = vcombine.low %v1127, %v1129
    %v1139 = vunpack.c.l.s4 1966171168
    %v1140 = vunpack.c.0.s8 %v1139
    %v1141 = vlaneseq
    %v1142 = vshrl.u32 %v1141, 7
    %v1143 = vsub.s32 %v1140, %v1142
    %v1144 = vrot.slane %v1137, %v1143
    %v1145 = vcombine.high %v1144, %v1144
    %v1147 = vunpack.c.l.s4 1966171168
    %v1148 = vunpack.c.0.s8 %v1147
    %v1149 = vlaneseq
    %v1150 = vshrl.u32 %v1149, 7
    %v1151 = vsub.s32 %v1148, %v1150
    %v1152 = vrot.slane %v1144, %v1151
    %v1154 = vunpack.c.l.s4 1966171168
    %v1155 = vunpack.c.0.s8 %v1154
    %v1156 = vlaneseq
    %v1157 = vshrl.u32 %v1156, 7
    %v1158 = vsub.s32 %v1155, %v1157
    %v1159 = vrot.slane %v1145, %v1158
    %v1160 = vlaneseq
    %v1161 = vshrl.u32 %v1160, 7
    %v1162 = vsub.s32 0, %v1161
    %v1163 = vrot.slane %v1152, %v1162
    %v1164 = vlaneseq
    %v1165 = vshrl.u32 %v1164, 7
    %v1166 = vsub.s32 1, %v1165
    %v1167 = vrot.slane %v1152, %v1166
    %v1168 = vlaneseq
    %v1169 = vshrl.u32 %v1168, 7
    %v1170 = vsub.s32 0, %v1169
    %v1171 = vrot.slane %v1159, %v1170
    %v1172 = vlaneseq
    %v1173 = vshrl.u32 %v1172, 7
    %v1174 = vsub.s32 1, %v1173
    %v1175 = vrot.slane %v1159, %v1174
    %v1180 = vmul.f32 %v1131, %v1163
    %v1181 = vmul.f32 %v1132, %v1167
    %v1182 = vmul.f32 %v1133, %v1171
    %v1183 = vmul.f32 %v1134, %v1175
    %v1184 = vadd.f32 %v1180, %v1181
    %1185 = vadd.xlane.f32.xlu0 %v1184
    %v1186 = vpop.xlane.xlu0 %1185
    %v1187 = vadd.f32 %v1182, %v1183
    %1188 = vadd.xlane.f32.xlu0 %v1187
    %v1189 = vpop.xlane.xlu0 %1188
    %v1190 = vmul.f32 %v357, %v615
    %v1191 = vmul.f32 %v359, %v617
    %v1192 = vmul.f32 %v363, %v621
    %v1193 = vmul.f32 %v365, %v623
    %v1194 = vmul.f32 %v1190, %v526
    %v1195 = vmul.f32 %v1191, %v528
    %v1196 = vmul.f32 %v1192, %v532
    %v1197 = vmul.f32 %v1193, %v534
    %v1198 = vadd.f32 %v1194, %v1195
    %1199 = vadd.xlane.f32.xlu0 %v1198
    %v1200 = vpop.xlane.xlu0 %1199
    %v1201 = vadd.f32 %v1196, %v1197
    %1202 = vadd.xlane.f32.xlu0 %v1201
    %v1203 = vpop.xlane.xlu0 %1202
    %v1206 = vlaneseq
    %v1207 = vshrl.u32 %v1206, 7
    %v1208 = vsub.s32 %v48, %v1207
    %v1209 = vrot.slane %v1186, %v1208
    %v1210 = vlaneseq
    %v1211 = vshrl.u32 %v1210, 7
    %v1212 = vsub.s32 %v48, %v1211
    %v1213 = vrot.slane %v1189, %v1212
    %v1214 = vsel %vm857, %v1213, %v1209
    %v1216 = vsel %vm860, %v1214, -inf
    %1217 = vmax.xlane.f32.xlu0 %v1216
    %v1218 = vpop.xlane.xlu0 %1217
    %v1220 = vlaneseq
    %v1221 = vshrl.u32 %v1220, 7
    %v1222 = vsub.s32 0, %v1221
    %v1223 = vrot.slane %v1218, %v1222
    %v1224 = vlaneseq
    %v1225 = vshrl.u32 %v1224, 7
    %v1226 = vsub.s32 1, %v1225
    %v1227 = vrot.slane %v1218, %v1226
    %v1230 = vsub.f32 %v1186, %v1223
    %v1231 = vsub.f32 %v1189, %v1227
    %v1232 = vmul.f32 %v1230, 1.442695
    %v1233 = vpow.pop %v1232
    %v1234 = vmul.f32 %v1231, 1.442695
    %v1235 = vpow.pop %v1234
    %1238 = vset.pattern.permute.xlu0 0
    %1239 = vperm.xlu0 %1238, %v1233
    %v1240 = vpop.permute.xlu0 %1239
    %1241 = vset.pattern.permute.xlu0 0
    %1242 = vperm.xlu0 %1241, %v1235
    %v1243 = vpop.permute.xlu0 %1242
    %v1244 = vlaneseq
    %v1245 = vshrl.u32 %v1244, 7
    %v1246 = vsub.s32 %v48, %v1245
    %v1247 = vrot.slane %v1240, %v1246
    %v1248 = vlaneseq
    %v1249 = vshrl.u32 %v1248, 7
    %v1250 = vsub.s32 %v48, %v1249
    %v1251 = vrot.slane %v1243, %v1250
    %v1252 = vsel %vm857, %v1251, %v1247
    %v1254 = vsel %vm860, %v1252, 0.0
    %1255 = vadd.xlane.f32.xlu0 %v1254
    %v1256 = vpop.xlane.xlu0 %1255
    %v1257 = vrcp.pop %v1256
    %v1259 = vlaneseq
    %v1260 = vshrl.u32 %v1259, 7
    %v1261 = vsub.s32 0, %v1260
    %v1262 = vrot.slane %v1257, %v1261
    %v1263 = vlaneseq
    %v1264 = vshrl.u32 %v1263, 7
    %v1265 = vsub.s32 1, %v1264
    %v1266 = vrot.slane %v1257, %v1265
    %v1269 = vmul.f32 %v1233, %v1262
    %v1270 = vmul.f32 %v1235, %v1266
    %1272 = vset.pattern.permute.xlu0 0
    %1273 = vperm.xlu0 %1272, %v1269
    %v1274 = vpop.permute.xlu0 %1273
    %1277 = vset.pattern.permute.xlu0 0
    %1278 = vperm.xlu0 %1277, %v1270
    %v1279 = vpop.permute.xlu0 %1278
    %v1281 = vmul.f32 %v228, %v1274
    %v1282 = vmul.f32 %v233, %v1279
    %v1283 = vsel %vm265, %v1281, 0.0
    %v1284 = vrot.slane %v1283, 4
    %v1285 = vadd.f32 %v1283, %v1284
    %v1286 = vrot.slane %v1285, 2
    %v1287 = vadd.f32 %v1285, %v1286
    %v1288 = vrot.slane %v1287, 1
    %v1289 = vadd.f32 %v1287, %v1288
    %v1290 = vsel %vm265, %v1282, 0.0
    %v1291 = vrot.slane %v1290, 4
    %v1292 = vadd.f32 %v1290, %v1291
    %v1293 = vrot.slane %v1292, 2
    %v1294 = vadd.f32 %v1292, %v1293
    %v1295 = vrot.slane %v1294, 1
    %v1296 = vadd.f32 %v1294, %v1295
    %v1299 = vsel %vm857, %v1296, %v1289
    %v1301 = vadd.f32 %v1017, %v1299
    %v1303 = vsel %vm265, %v1301, 0
    %1305 = vmatprep.subr.mxu0 0.0
    %1306 = vmatpush1.msra.mxu0 %v30
    %1307 = vmatprep.subr.mxu0 0.0
    %1308 = vmatpush1.msra.mxu0 %v31
    %1309 = vmatprep.subr.mxu0 0.0
    %1310 = vmatpush1.msra.mxu0 0.0
    %1311 = vmatprep.subr.mxu0 0.0
    %1312 = vmatpush1.msra.mxu0 0.0
    %1313 = vmatprep.subr.mxu0 0.0
    %1314 = vmatpush1.msra.mxu0 0.0
    %1315 = vmatprep.subr.mxu0 0.0
    %1316 = vmatpush1.msra.mxu0 0.0
    %1317 = vmatprep.subr.mxu0 0.0
    %1318 = vmatpush1.msra.mxu0 0.0
    %1319 = vmatprep.subr.mxu0 0.0
    %1320 = vmatpush1.msra.mxu0 0.0
    %1321 = vmatprep.subr.mxu0 0.0
    %1322 = vmatpush1.msra.mxu0 0.0
    %1323 = vmatprep.subr.mxu0 0.0
    %1324 = vmatpush1.msra.mxu0 0.0
    %1325 = vmatprep.subr.mxu0 0.0
    %1326 = vmatpush1.msra.mxu0 0.0
    %1327 = vmatprep.subr.mxu0 0.0
    %1328 = vmatpush1.msra.mxu0 0.0
    %1329 = vmatprep.subr.mxu0 0.0
    %1330 = vmatpush1.msra.mxu0 0.0
    %1331 = vmatprep.subr.mxu0 0.0
    %1332 = vmatpush1.msra.mxu0 0.0
    %1333 = vmatprep.subr.mxu0 0.0
    %1334 = vmatpush1.msra.mxu0 0.0
    %1335 = vmatprep.subr.mxu0 0.0
    %1336 = vmatpush1.msra.mxu0 0.0
    %1337 = vmatprep.subr.mxu0 0.0
    %1338 = vmatpush1.msra.mxu0 0.0
    %1339 = vmatprep.subr.mxu0 0.0
    %1340 = vmatpush1.msra.mxu0 0.0
    %1341 = vmatprep.subr.mxu0 0.0
    %1342 = vmatpush1.msra.mxu0 0.0
    %1343 = vmatprep.subr.mxu0 0.0
    %1344 = vmatpush1.msra.mxu0 0.0
    %1345 = vmatprep.subr.mxu0 0.0
    %1346 = vmatpush1.msra.mxu0 0.0
    %1347 = vmatprep.subr.mxu0 0.0
    %1348 = vmatpush1.msra.mxu0 0.0
    %1349 = vmatprep.subr.mxu0 0.0
    %1350 = vmatpush1.msra.mxu0 0.0
    %1351 = vmatprep.subr.mxu0 0.0
    %1352 = vmatpush1.msra.mxu0 0.0
    %1353 = vmatprep.subr.mxu0 0.0
    %1354 = vmatpush1.msra.mxu0 0.0
    %1355 = vmatprep.subr.mxu0 0.0
    %1356 = vmatpush1.msra.mxu0 0.0
    %1357 = vmatprep.subr.mxu0 0.0
    %1358 = vmatpush1.msra.mxu0 0.0
    %1359 = vmatprep.subr.mxu0 0.0
    %1360 = vmatpush1.msra.mxu0 0.0
    %1361 = vmatprep.subr.mxu0 0.0
    %1362 = vmatpush1.msra.mxu0 0.0
    %1363 = vmatprep.subr.mxu0 0.0
    %1364 = vmatpush1.msra.mxu0 0.0
    %1365 = vmatprep.subr.mxu0 0.0
    %1366 = vmatpush1.msra.mxu0 0.0
    %1367 = vmatprep.subr.mxu0 0.0
    %1368 = vmatpush1.msra.mxu0 0.0
    %1369 = vmatprep.mubr.f32.mxu0 0.0
    %1370 = vmatmul.mubr.f32.gmra.mrb[0].mxu0 %v1303
    %v1371 = vpop.f32.mrb[0].mxu0
    %v1372 = vadd.f32 0.0, %v1371
    %v1373 = vpop.f32.mrb[0].mxu0
    %1374 = vdwg.mxu0
    %v1375 = vadd.f32 %v1020, %v1289
    %v1376 = vadd.f32 %v1021, %v1296
    %v1377 = vsub.f32 0.0, %v1200
    %v1378 = vsub.f32 0.0, %v1203
    %v1379 = vmul.f32 %v1377, 1.442695
    %v1380 = vpow.pop %v1379
    %v1381 = vmul.f32 %v1378, 1.442695
    %v1382 = vpow.pop %v1381
    %v1383 = vadd.f32 %v1380, 1.0
    %v1384 = vadd.f32 %v1382, 1.0
    %v1385 = vrcp.pop %v1383
    %v1386 = vrcp.pop %v1384
    %v1389 = vlaneseq
    %v1390 = vshrl.u32 %v1389, 7
    %v1391 = vsub.s32 %v48, %v1390
    %v1392 = vrot.slane %v1385, %v1391
    %v1393 = vlaneseq
    %v1394 = vshrl.u32 %v1393, 7
    %v1395 = vsub.s32 %v48, %v1394
    %v1396 = vrot.slane %v1386, %v1395
    %v1397 = vsel %vm857, %v1396, %v1392
    %v1399 = vsel %vm860, %v1397, 0.0
    %1400 = vadd.xlane.f32.xlu0 %v1399
    %v1401 = vpop.xlane.xlu0 %1400
    %v1402 = vsel %vm1047, %v1401, 0.0
    %v1403 = vrot.slane %v1402, 4
    %v1404 = vadd.f32 %v1402, %v1403
    %v1405 = vrot.slane %v1404, 2
    %v1406 = vadd.f32 %v1404, %v1405
    %v1407 = vrot.slane %v1406, 1
    %v1408 = vadd.f32 %v1406, %v1407
    %v1409 = vmul.f32 %v1408, 0.0625
    %v1410 = vadd.f32 %v1056, %v1409
    %v1413 = vsel %vm857, %v1376, %v1375
    %v1415 = vmul.f32 %v1372, %v1413
    %vm1416 = vcmask 123904
    %v1417 = vsel %vm1416, %v1415, 0.0
    %1418 = vadd.xlane.f32.xlu0 %v1417
    %v1419 = vpop.xlane.xlu0 %1418
    %v1420 = vsub.f32 0.0, %v1419
    %v1421 = vmul.f32 %v1420, 1.442695
    %v1422 = vpow.pop %v1421
    %v1423 = vadd.f32 %v1422, 1.0
    %v1424 = vrcp.pop %v1423
    %v1425 = vmul.f32 1.0, %v1424
    %v1426 = vmax.f32 %v1419, 0.0
    %v1427 = vand.u32 2147483647, %v1419
    %v1428 = vsub.f32 0.0, %v1427
    %v1429 = vmul.f32 %v1428, 1.442695
    %v1430 = vpow.pop %v1429
    %v1431 = vadd.f32 %v1430, 1.0
    %v1432 = vlog2.pop %v1431
    %v1433 = vmul.f32 %v1432, 0.6931472
    %v1434 = vadd.f32 %v1426, %v1433
    %v1435 = vmul.f32 %v46, %v1419
    %v1436 = vsub.f32 %v1434, %v1435
    %v1437 = vadd.f32 %v1436, 0.0
    %vm1438 = vcmask 1024
    %v1439 = vsel %vm1438, %v1437, 0.0
    %v1440 = vrot.slane %v1439, 4
    %v1441 = vadd.f32 %v1439, %v1440
    %v1442 = vrot.slane %v1441, 2
    %v1443 = vadd.f32 %v1441, %v1442
    %v1444 = vrot.slane %v1443, 1
    %v1445 = vadd.f32 %v1443, %v1444
    %v1446 = vmul.f32 %v1445, 0.5
    %v1447 = vmul.f32 %v1410, -0.01
    %v1448 = vmul.f32 %v699, 1e-07
    %v1449 = vadd.f32 %v1446, %v1447
    %v1450 = vadd.f32 %v1449, %v1448
    %1451 = vst [vmem:[#allocation2] sm:$0xff] 0.0
    %1452 = vst.msk [vmem:[#allocation2] sm:$0x3] %vm1416, %v1372
    %1453 = vst.msk [vmem:[#allocation2 + $0x2] sm:$0x3] %vm1416, %v944
    %1454 = vst.msk [vmem:[#allocation2 + $0x4] sm:$0x3] %vm1416, %v1299
    %1455 = vst.msk [vmem:[#allocation2 + $0x6] sm:$0x3] %vm1438, %v1425
    %1457 = vrot.lane.b32.xlu0 %v1446, 16
    %v1458 = vpop.permute.xlu0 %1457
    %vm1460 = vcmask 131200
    %1461 = vst.msk [vmem:[#allocation2] sm:$0x1] %vm1460, %v1458
    %vm1462 = vcmask 139400
    %1463 = vst.msk [vmem:[#allocation2] sm:$0x1] %vm1462, %v1447
    %vm1464 = vcmask 147600
    %1465 = vst.msk [vmem:[#allocation2] sm:$0x1] %vm1464, %v1448
    %1467 = vrot.lane.b32.xlu0 %v1450, 19
    %v1468 = vpop.permute.xlu0 %1467
    %vm1470 = vcmask 155800
    %1471 = vst.msk [vmem:[#allocation2] sm:$0x1] %vm1470, %v1468
    // Predicated region
    $region18: #{tpu_custom_call.1} parent=1 // pred_check
      _
    $region19: #{tpu_custom_call.1} parent=1 // pred_check_branch
      %1473 = sbr.rel (0) target = $region21
    $region20: #{tpu_custom_call.1} parent=1 // pred_region
      %s1475 = ssub.s32 128, 128
      %1476 = vsyncadd [#allocation3], %s1475
      %s1478 = sshll.u32 [#allocation2], 4
      %s1479 = int_to_ptr.vmem [resolvable:$true] %s1478
      %1481 = dma.vmem_to_hbm [thread:$0]  %s1479, 128, %s4, [#allocation3]
    $region21: #{tpu_custom_call.1} parent=1 // pred_fallthru
      _
    // Predicated region
    $region22: #{tpu_custom_call.1} parent=1 // pred_check
      _
    $region23: #{tpu_custom_call.1} parent=1 // pred_check_branch
      %1483 = sbr.rel (0) target = $region25
    $region24: #{tpu_custom_call.1} parent=1 // pred_region
      %1484 = dma.done [#allocation3], 128
    $region25: #{tpu_custom_call.1} parent=1 // pred_fallthru
      _
    %1485 = vsyncpa [#allocation3], 1

</llo_original>
